<compile_context>
chip_gen: v5e
topology: v5e:2x2
jax: 0.10.0
libtpu: 0.0.40
codegen_flags: <defaults>
</compile_context>

<pallas_src>
import numpy as np
import jax
import jax.numpy as jnp
from jax.experimental import pallas as pl
from jax.experimental.pallas import tpu as pltpu

WINDOW_SIZE = 11
SIGMA = 1.5
C1 = 0.01 ** 2
C2 = 0.03 ** 2


def _gaussian_window(window_size, sigma):
    xs = np.arange(window_size, dtype=np.float64)
    g = np.exp(-((xs - window_size // 2) ** 2) / (2.0 * sigma ** 2))
    g = g / g.sum()
    return g.astype(np.float32)


def _banded_conv_matrix(n, gauss, pad):
    """(n, n) matrix R s.t. (x @ R)[:, j] == sum_k g[k] * x[:, j + k - pad]
    (zero-padded 'same' conv along the contracted axis)."""
    K = np.zeros((n, n), dtype=np.float32)
    for dst in range(n):
        for k in range(len(gauss)):
            src = dst + k - pad
            if 0 <= src < n:
                K[src, dst] = gauss[k]
    return K


def _col_diff_matrix(w):
    """(w, w) D s.t. (x @ D)[:, j] == x[:, j] - x[:, j+1] for j < w-1; column w-1 is 0."""
    D = np.zeros((w, w), dtype=np.float32)
    for j in range(w - 1):
        D[j, j] = 1.0
        D[j + 1, j] = -1.0
    return D


def _row_diff_matrix(c, h):
    """(c*h, c*h) E s.t. (E @ x)[r, :] == x[r, :] - x[r+1, :] within each channel;
    rows with r % h == h-1 (last image row of a channel) are zero."""
    n = c * h
    E = np.zeros((n, n), dtype=np.float32)
    for r in range(n):
        if r % h != h - 1:
            E[r, r] = 1.0
            E[r, r + 1] = -1.0
    return E


def _make_loss_kernel(B, C, Cx, H, W):
    CH = C * H
    # Global element counts; partials are pre-scaled by 1/N so the cross-batch sum
    # in the wrapper stays O(1).
    n_ssim = float(B * C * H * W)
    n_sx = float(B * C * H * (W - 1))
    n_sy = float(B * C * (H - 1) * W)
    n_l1 = float(B * C * H * W)

    def kernel(khw_ref, kvc_ref, dw_ref, eh_ref, ehx_ref,
               pred_ref, targ_ref, img_ref, out_ref):
        khw = khw_ref[...]    # (W, W)      Gaussian H-pass (right-mult)
        kvc = kvc_ref[...]    # (CH, CH)    Gaussian V-pass, I_C (x) kvh (left-mult)
        dw = dw_ref[...]      # (W, W)      column difference (dx), right-mult
        eh = eh_ref[...]      # (CH, CH)    per-channel row difference (dy), left-mult
        ehx = ehx_ref[...]    # (Cx*H, Cx*H) row difference for X

        xp = pred_ref[0].astype(jnp.float32)   # (C*H,  W)   y_pred[b]
        yt = targ_ref[0].astype(jnp.float32)   # (C*H,  W)   Y[b]
        xi = img_ref[0].astype(jnp.float32)    # (Cx*H, W)   X[b]

        # -------- SSIM: separable Gaussian conv as rank-2 MXU matmuls --------
        stack = jnp.concatenate([xp, yt, xp * xp, yt * yt, xp * yt], axis=0)   # (5CH, W)
        h2 = jnp.dot(stack, khw, preferred_element_type=jnp.float32)           # (5CH, W)
        mu_x = jnp.dot(kvc, h2[0 * CH:1 * CH, :], preferred_element_type=jnp.float32)
        mu_y = jnp.dot(kvc, h2[1 * CH:2 * CH, :], preferred_element_type=jnp.float32)
        exx = jnp.dot(kvc, h2[2 * CH:3 * CH, :], preferred_element_type=jnp.float32)
        eyy = jnp.dot(kvc, h2[3 * CH:4 * CH, :], preferred_element_type=jnp.float32)
        exy = jnp.dot(kvc, h2[4 * CH:5 * CH, :], preferred_element_type=jnp.float32)

        sxx = exx - mu_x * mu_x
        syy = eyy - mu_y * mu_y
        sxy = exy - mu_x * mu_y
        num = (2.0 * mu_x * mu_y + C1) * (2.0 * sxy + C2)
        den = (mu_x * mu_x + mu_y * mu_y + C1) * (sxx + syy + C2)
        # EUP approximate reciprocal + one Newton-Raphson refinement (~f32 accurate).
        r = pl.reciprocal(den, approx=True)
        r = r * (2.0 - den * r)
        ssim_sum = jnp.sum(num * r)

        # -------- depth smoothness: gradients as banded +/-1 matmuls ----------
        # Invalid last column / last row are already zero in dw / eh / ehx.
        dxd = jnp.dot(xp, dw, preferred_element_type=jnp.float32)     # (CH,   W)
        dxi = jnp.dot(xi, dw, preferred_element_type=jnp.float32)     # (CxH,  W)
        dyd = jnp.dot(eh, xp, preferred_element_type=jnp.float32)     # (CH,   W)
        dyi = jnp.dot(ehx, xi, preferred_element_type=jnp.float32)    # (CxH,  W)

        wx = jnp.exp(-jnp.mean(jnp.abs(dxi).reshape(Cx, H, W), axis=0))   # (H, W)
        wy = jnp.exp(-jnp.mean(jnp.abs(dyi).reshape(Cx, H, W), axis=0))   # (H, W)
        sx_sum = jnp.sum(jnp.abs(dxd).reshape(C, H, W) * wx[None, :, :])
        sy_sum = jnp.sum(jnp.abs(dyd).reshape(C, H, W) * wy[None, :, :])

        # -------- L1 ----------------------------------------------------------
        l1_sum = jnp.sum(jnp.abs(xp - yt))

        # Pre-scaled, pre-weighted per-sample partial of the final loss; the
        # constant "+2" from 2*(1 - mean_ssim) is added in the wrapper.
        partial = ((-2.0 / n_ssim) * ssim_sum
                   + (1.0 / n_sx) * sx_sum
                   + (1.0 / n_sy) * sy_sum
                   + (0.001 / n_l1) * l1_sum)
        # Lane-dense unmasked (1, 8, 128) store per grid step.
        out_ref[...] = jnp.broadcast_to(partial, out_ref.shape).astype(jnp.float32)

    return kernel


def convnet_model_loss_pallas(y_pred, Y, X, window_size=WINDOW_SIZE):
    """loss = 2*ssim_loss(y_pred, Y) + depth_smoothness(y_pred, X) + 0.001*L1."""
    B, C, H, W = y_pred.shape
    Bx, Cx, Hx, Wx = X.shape
    assert Y.shape == y_pred.shape and (Bx, Hx, Wx) == (B, H, W)
    pad = window_size // 2
    g = _gaussian_window(window_size, SIGMA)

    # Constant banded matrices (zero 'same' padding / masking is folded in).
    khw = jnp.asarray(_banded_conv_matrix(W, g, pad))                     # (W, W)
    kvh = _banded_conv_matrix(H, g, pad).T.astype(np.float32)             # (H, H)
    kvc = jnp.asarray(np.kron(np.eye(C, dtype=np.float32), kvh))          # (CH, CH)
    dw = jnp.asarray(_col_diff_matrix(W))                                 # (W, W)
    eh = jnp.asarray(_row_diff_matrix(C, H))                              # (CH, CH)
    ehx = jnp.asarray(_row_diff_matrix(Cx, H))                            # (CxH, CxH)

    # Free metadata reshapes: each sample becomes one 2-D (C*H, W) slab.
    yp2 = y_pred.reshape(B, C * H, W)
    yt2 = Y.reshape(B, C * H, W)
    xi2 = X.reshape(B, Cx * H, W)

    CH, CxH = C * H, Cx * H
    kernel = _make_loss_kernel(B, C, Cx, H, W)

    partials = pl.pallas_call(
        kernel,
        out_shape=jax.ShapeDtypeStruct((B, 8, 128), jnp.float32),
        grid_spec=pltpu.PrefetchScalarGridSpec(
            num_scalar_prefetch=0,
            grid=(B,),   # one batch sample per step; B=2 feeds both v7x TCs
            in_specs=[
                pl.BlockSpec((W, W), lambda b: (0, 0)),
                pl.BlockSpec((CH, CH), lambda b: (0, 0)),
                pl.BlockSpec((W, W), lambda b: (0, 0)),
                pl.BlockSpec((CH, CH), lambda b: (0, 0)),
                pl.BlockSpec((CxH, CxH), lambda b: (0, 0)),
                pl.BlockSpec((1, CH, W), lambda b: (b, 0, 0)),
                pl.BlockSpec((1, CH, W), lambda b: (b, 0, 0)),
                pl.BlockSpec((1, CxH, W), lambda b: (b, 0, 0)),
            ],
            out_specs=pl.BlockSpec((1, 8, 128), lambda b: (b, 0, 0)),
        ),
        compiler_params=pltpu.CompilerParams(
            dimension_semantics=("parallel",),
            vmem_limit_bytes=32 * 1024 * 1024,
        ),
    )(khw, kvc, dw, eh, ehx, yp2, yt2, xi2)

    # Tiny final reduction + the constant from 2*(1 - mean_ssim).
    return 2.0 + jnp.sum(partials[:, 0, 0])


# ----------------------- pure-JAX reference (for testing) -----------------------

def _ssim_ref(y_pred, y, window_size=WINDOW_SIZE):
    B, C, H, W = y_pred.shape
    pad = window_size // 2
    g1 = jnp.asarray(_gaussian_window(window_size, SIGMA))
    w2d = jnp.outer(g1, g1)
    w = jnp.tile(w2d[None, None], (C, 1, 1, 1))  # (C, 1, K, K) depthwise

    def conv(a):
        return jax.lax.conv_general_dilated(
            a, w, window_strides=(1, 1), padding=[(pad, pad), (pad, pad)],
            dimension_numbers=("NCHW", "OIHW", "NCHW"), feature_group_count=C)

    x = y_pred.astype(jnp.float32)
    yy = y.astype(jnp.float32)
    mu_x = conv(x)
    mu_y = conv(yy)
    sxx = conv(x * x) - mu_x ** 2
    syy = conv(yy * yy) - mu_y ** 2
    sxy = conv(x * yy) - mu_x * mu_y
    ssim_map = ((2 * mu_x * mu_y + C1) * (2 * sxy + C2)) / (
        (mu_x ** 2 + mu_y ** 2 + C1) * (sxx + syy + C2))
    return 1.0 - jnp.mean(ssim_map)


def convnet_model_loss_ref(y_pred, Y, X, window_size=WINDOW_SIZE):
    ssim_val = _ssim_ref(y_pred, Y, window_size)
    dxd = y_pred[:, :, :, :-1] - y_pred[:, :, :, 1:]
    dyd = y_pred[:, :, :-1, :] - y_pred[:, :, 1:, :]
    dxi = X[:, :, :, :-1] - X[:, :, :, 1:]
    dyi = X[:, :, :-1, :] - X[:, :, 1:, :]
    wx = jnp.exp(-jnp.mean(jnp.abs(dxi), axis=1, keepdims=True))
    wy = jnp.exp(-jnp.mean(jnp.abs(dyi), axis=1, keepdims=True))
    smooth_val = jnp.mean(jnp.abs(dxd * wx)) + jnp.mean(jnp.abs(dyd * wy))
    l1_val = jnp.mean(jnp.abs(y_pred - Y))
    return 2.0 * ssim_val + smooth_val + 0.001 * l1_val


if __name__ == "__main__":
    key = jax.random.PRNGKey(0)
    k1, k2, k3 = jax.random.split(key, 3)
    B, C, H, W = 2, 4, 16, 16
    y_pred = jax.random.uniform(k1, (B, C, H, W), dtype=jnp.float32)
    Y = jax.random.uniform(k2, (B, C, H, W), dtype=jnp.float32)
    X = jax.random.uniform(k3, (B, C, H, W), dtype=jnp.float32)

    loss = jax.block_until_ready(convnet_model_loss_pallas(y_pred, Y, X))
    ref = jax.block_until_ready(convnet_model_loss_ref(y_pred, Y, X))

    assert bool(jnp.isfinite(loss)), "non-finite loss"
    np.testing.assert_allclose(np.asarray(loss), np.asarray(ref),
                               rtol=2e-4, atol=2e-5)
    print("KERNEL_OK")
</pallas_src>

<mosaic_0001>
module attributes {stable_mosaic.version = 11 : i64} {
  func.func @kernel(%arg0: i32, %arg1: memref<16x16xf32, #tpu.memory_space<vmem>>, %arg2: memref<64x64xf32, #tpu.memory_space<vmem>>, %arg3: memref<16x16xf32, #tpu.memory_space<vmem>>, %arg4: memref<64x64xf32, #tpu.memory_space<vmem>>, %arg5: memref<64x64xf32, #tpu.memory_space<vmem>>, %arg6: memref<1x64x16xf32, #tpu.memory_space<vmem>>, %arg7: memref<1x64x16xf32, #tpu.memory_space<vmem>>, %arg8: memref<1x64x16xf32, #tpu.memory_space<vmem>>, %arg9: memref<1x8x128xf32, #tpu.memory_space<vmem>>) attributes {dimension_semantics = [#tpu.dimension_semantics<parallel>], iteration_bounds = array<i64: 2>, scalar_prefetch = 0 : i64, scratch_operands = 0 : i64, tpu.core_type = #tpu.core_type<tc>, window_params = [{pipeline_mode = #tpu.pipeline_mode<synchronous>, transform_indices = @transform_0, window_bounds = array<i64: 16, 16>}, {pipeline_mode = #tpu.pipeline_mode<synchronous>, transform_indices = @transform_1, window_bounds = array<i64: 64, 64>}, {pipeline_mode = #tpu.pipeline_mode<synchronous>, transform_indices = @transform_2, window_bounds = array<i64: 16, 16>}, {pipeline_mode = #tpu.pipeline_mode<synchronous>, transform_indices = @transform_3, window_bounds = array<i64: 64, 64>}, {pipeline_mode = #tpu.pipeline_mode<synchronous>, transform_indices = @transform_4, window_bounds = array<i64: 64, 64>}, {transform_indices = @transform_5, window_bounds = array<i64: 1, 64, 16>}, {transform_indices = @transform_6, window_bounds = array<i64: 1, 64, 16>}, {transform_indices = @transform_7, window_bounds = array<i64: 1, 64, 16>}, {transform_indices = @transform_8, window_bounds = array<i64: 1, 8, 128>}]} {
    %c0 = arith.constant 0 : index
    %c0_0 = arith.constant 0 : index
    %0 = vector.load %arg1[%c0, %c0_0] : memref<16x16xf32, #tpu.memory_space<vmem>>, vector<16x16xf32>
    %c0_1 = arith.constant 0 : index
    %c0_2 = arith.constant 0 : index
    %1 = vector.load %arg2[%c0_1, %c0_2] : memref<64x64xf32, #tpu.memory_space<vmem>>, vector<64x64xf32>
    %c0_3 = arith.constant 0 : index
    %c0_4 = arith.constant 0 : index
    %2 = vector.load %arg3[%c0_3, %c0_4] : memref<16x16xf32, #tpu.memory_space<vmem>>, vector<16x16xf32>
    %c0_5 = arith.constant 0 : index
    %c0_6 = arith.constant 0 : index
    %3 = vector.load %arg4[%c0_5, %c0_6] : memref<64x64xf32, #tpu.memory_space<vmem>>, vector<64x64xf32>
    %c0_7 = arith.constant 0 : index
    %c0_8 = arith.constant 0 : index
    %4 = vector.load %arg5[%c0_7, %c0_8] : memref<64x64xf32, #tpu.memory_space<vmem>>, vector<64x64xf32>
    %c0_9 = arith.constant 0 : index
    %c0_10 = arith.constant 0 : index
    %c0_11 = arith.constant 0 : index
    %5 = vector.load %arg6[%c0_9, %c0_10, %c0_11] : memref<1x64x16xf32, #tpu.memory_space<vmem>>, vector<1x64x16xf32>
    %6 = vector.shape_cast %5 : vector<1x64x16xf32> to vector<64x16xf32>
    %c0_12 = arith.constant 0 : index
    %c0_13 = arith.constant 0 : index
    %c0_14 = arith.constant 0 : index
    %7 = vector.load %arg7[%c0_12, %c0_13, %c0_14] : memref<1x64x16xf32, #tpu.memory_space<vmem>>, vector<1x64x16xf32>
    %8 = vector.shape_cast %7 : vector<1x64x16xf32> to vector<64x16xf32>
    %c0_15 = arith.constant 0 : index
    %c0_16 = arith.constant 0 : index
    %c0_17 = arith.constant 0 : index
    %9 = vector.load %arg8[%c0_15, %c0_16, %c0_17] : memref<1x64x16xf32, #tpu.memory_space<vmem>>, vector<1x64x16xf32>
    %10 = vector.shape_cast %9 : vector<1x64x16xf32> to vector<64x16xf32>
    %11 = arith.mulf %6, %6 : vector<64x16xf32>
    %12 = arith.mulf %8, %8 : vector<64x16xf32>
    %13 = arith.mulf %6, %8 : vector<64x16xf32>
    %14 = tpu.concatenate %6, %8, %11, %12, %13 in 0 : vector<64x16xf32>, vector<64x16xf32>, vector<64x16xf32>, vector<64x16xf32>, vector<64x16xf32> -> vector<320x16xf32>
    %cst = arith.constant dense<0.000000e+00> : vector<320x16xf32>
    %15 = tpu.matmul %14, %0, %cst {dimension_numbers = #tpu.dot_dimension_numbers<[1], [0], [0], [1], [0, 0, 1, 1], [], []>} : vector<320x16xf32>, vector<16x16xf32>, vector<320x16xf32> -> vector<320x16xf32>
    %16 = vector.extract_strided_slice %15 {offsets = [0, 0], sizes = [64, 16], strides = [1, 1]} : vector<320x16xf32> to vector<64x16xf32>
    %cst_18 = arith.constant dense<0.000000e+00> : vector<64x16xf32>
    %17 = tpu.matmul %1, %16, %cst_18 {dimension_numbers = #tpu.dot_dimension_numbers<[1], [0], [0], [1], [0, 0, 1, 1], [], []>} : vector<64x64xf32>, vector<64x16xf32>, vector<64x16xf32> -> vector<64x16xf32>
    %18 = vector.extract_strided_slice %15 {offsets = [64, 0], sizes = [64, 16], strides = [1, 1]} : vector<320x16xf32> to vector<64x16xf32>
    %cst_19 = arith.constant dense<0.000000e+00> : vector<64x16xf32>
    %19 = tpu.matmul %1, %18, %cst_19 {dimension_numbers = #tpu.dot_dimension_numbers<[1], [0], [0], [1], [0, 0, 1, 1], [], []>} : vector<64x64xf32>, vector<64x16xf32>, vector<64x16xf32> -> vector<64x16xf32>
    %20 = vector.extract_strided_slice %15 {offsets = [128, 0], sizes = [64, 16], strides = [1, 1]} : vector<320x16xf32> to vector<64x16xf32>
    %cst_20 = arith.constant dense<0.000000e+00> : vector<64x16xf32>
    %21 = tpu.matmul %1, %20, %cst_20 {dimension_numbers = #tpu.dot_dimension_numbers<[1], [0], [0], [1], [0, 0, 1, 1], [], []>} : vector<64x64xf32>, vector<64x16xf32>, vector<64x16xf32> -> vector<64x16xf32>
    %22 = vector.extract_strided_slice %15 {offsets = [192, 0], sizes = [64, 16], strides = [1, 1]} : vector<320x16xf32> to vector<64x16xf32>
    %cst_21 = arith.constant dense<0.000000e+00> : vector<64x16xf32>
    %23 = tpu.matmul %1, %22, %cst_21 {dimension_numbers = #tpu.dot_dimension_numbers<[1], [0], [0], [1], [0, 0, 1, 1], [], []>} : vector<64x64xf32>, vector<64x16xf32>, vector<64x16xf32> -> vector<64x16xf32>
    %24 = vector.extract_strided_slice %15 {offsets = [256, 0], sizes = [64, 16], strides = [1, 1]} : vector<320x16xf32> to vector<64x16xf32>
    %cst_22 = arith.constant dense<0.000000e+00> : vector<64x16xf32>
    %25 = tpu.matmul %1, %24, %cst_22 {dimension_numbers = #tpu.dot_dimension_numbers<[1], [0], [0], [1], [0, 0, 1, 1], [], []>} : vector<64x64xf32>, vector<64x16xf32>, vector<64x16xf32> -> vector<64x16xf32>
    %26 = arith.mulf %17, %17 : vector<64x16xf32>
    %27 = arith.subf %21, %26 : vector<64x16xf32>
    %28 = arith.mulf %19, %19 : vector<64x16xf32>
    %29 = arith.subf %23, %28 : vector<64x16xf32>
    %30 = arith.mulf %17, %19 : vector<64x16xf32>
    %31 = arith.subf %25, %30 : vector<64x16xf32>
    %cst_23 = arith.constant 2.000000e+00 : f32
    %32 = vector.broadcast %cst_23 : f32 to vector<64x16xf32>
    %33 = arith.mulf %32, %17 : vector<64x16xf32>
    %34 = arith.mulf %33, %19 : vector<64x16xf32>
    %cst_24 = arith.constant 9.99999974E-5 : f32
    %35 = vector.broadcast %cst_24 : f32 to vector<64x16xf32>
    %36 = arith.addf %34, %35 : vector<64x16xf32>
    %cst_25 = arith.constant 2.000000e+00 : f32
    %37 = vector.broadcast %cst_25 : f32 to vector<64x16xf32>
    %38 = arith.mulf %37, %31 : vector<64x16xf32>
    %cst_26 = arith.constant 8.99999984E-4 : f32
    %39 = vector.broadcast %cst_26 : f32 to vector<64x16xf32>
    %40 = arith.addf %38, %39 : vector<64x16xf32>
    %41 = arith.mulf %36, %40 : vector<64x16xf32>
    %42 = arith.mulf %17, %17 : vector<64x16xf32>
    %43 = arith.mulf %19, %19 : vector<64x16xf32>
    %44 = arith.addf %42, %43 : vector<64x16xf32>
    %cst_27 = arith.constant 9.99999974E-5 : f32
    %45 = vector.broadcast %cst_27 : f32 to vector<64x16xf32>
    %46 = arith.addf %44, %45 : vector<64x16xf32>
    %47 = arith.addf %27, %29 : vector<64x16xf32>
    %cst_28 = arith.constant 8.99999984E-4 : f32
    %48 = vector.broadcast %cst_28 : f32 to vector<64x16xf32>
    %49 = arith.addf %47, %48 : vector<64x16xf32>
    %50 = arith.mulf %46, %49 : vector<64x16xf32>
    %51 = tpu.reciprocal %50 {approx = true} : vector<64x16xf32> -> vector<64x16xf32>
    %52 = arith.mulf %50, %51 : vector<64x16xf32>
    %cst_29 = arith.constant 2.000000e+00 : f32
    %53 = vector.broadcast %cst_29 : f32 to vector<64x16xf32>
    %54 = arith.subf %53, %52 : vector<64x16xf32>
    %55 = arith.mulf %51, %54 : vector<64x16xf32>
    %56 = arith.mulf %41, %55 : vector<64x16xf32>
    %57 = vector.shape_cast %56 : vector<64x16xf32> to vector<1x64x16xf32>
    %cst_30 = arith.constant dense<0.000000e+00> : vector<1xf32>
    %58 = vector.multi_reduction <add>, %57, %cst_30 [1, 2] : vector<1x64x16xf32> to vector<1xf32>
    %59 = vector.shape_cast %58 : vector<1xf32> to vector<1x1x1xf32>
    %60 = vector.extract %59[0, 0, 0] : f32 from vector<1x1x1xf32>
    %cst_31 = arith.constant dense<0.000000e+00> : vector<64x16xf32>
    %61 = tpu.matmul %6, %2, %cst_31 {dimension_numbers = #tpu.dot_dimension_numbers<[1], [0], [0], [1], [0, 0, 1, 1], [], []>} : vector<64x16xf32>, vector<16x16xf32>, vector<64x16xf32> -> vector<64x16xf32>
    %cst_32 = arith.constant dense<0.000000e+00> : vector<64x16xf32>
    %62 = tpu.matmul %10, %2, %cst_32 {dimension_numbers = #tpu.dot_dimension_numbers<[1], [0], [0], [1], [0, 0, 1, 1], [], []>} : vector<64x16xf32>, vector<16x16xf32>, vector<64x16xf32> -> vector<64x16xf32>
    %cst_33 = arith.constant dense<0.000000e+00> : vector<64x16xf32>
    %63 = tpu.matmul %3, %6, %cst_33 {dimension_numbers = #tpu.dot_dimension_numbers<[1], [0], [0], [1], [0, 0, 1, 1], [], []>} : vector<64x64xf32>, vector<64x16xf32>, vector<64x16xf32> -> vector<64x16xf32>
    %cst_34 = arith.constant dense<0.000000e+00> : vector<64x16xf32>
    %64 = tpu.matmul %4, %10, %cst_34 {dimension_numbers = #tpu.dot_dimension_numbers<[1], [0], [0], [1], [0, 0, 1, 1], [], []>} : vector<64x64xf32>, vector<64x16xf32>, vector<64x16xf32> -> vector<64x16xf32>
    %65 = math.absf %62 : vector<64x16xf32>
    %66 = vector.shape_cast %65 : vector<64x16xf32> to vector<4x16x16xf32>
    %cst_35 = arith.constant dense<0.000000e+00> : vector<16x16xf32>
    %67 = vector.multi_reduction <add>, %66, %cst_35 [0] : vector<4x16x16xf32> to vector<16x16xf32>
    %cst_36 = arith.constant 4.000000e+00 : f32
    %68 = vector.broadcast %cst_36 : f32 to vector<16x16xf32>
    %69 = arith.divf %67, %68 : vector<16x16xf32>
    %cst_37 = arith.constant 0.000000e+00 : f32
    %70 = vector.broadcast %cst_37 : f32 to vector<16x16xf32>
    %71 = arith.subf %70, %69 : vector<16x16xf32>
    %72 = math.exp %71 : vector<16x16xf32>
    %73 = math.absf %64 : vector<64x16xf32>
    %74 = vector.shape_cast %73 : vector<64x16xf32> to vector<4x16x16xf32>
    %cst_38 = arith.constant dense<0.000000e+00> : vector<16x16xf32>
    %75 = vector.multi_reduction <add>, %74, %cst_38 [0] : vector<4x16x16xf32> to vector<16x16xf32>
    %cst_39 = arith.constant 4.000000e+00 : f32
    %76 = vector.broadcast %cst_39 : f32 to vector<16x16xf32>
    %77 = arith.divf %75, %76 : vector<16x16xf32>
    %cst_40 = arith.constant 0.000000e+00 : f32
    %78 = vector.broadcast %cst_40 : f32 to vector<16x16xf32>
    %79 = arith.subf %78, %77 : vector<16x16xf32>
    %80 = math.exp %79 : vector<16x16xf32>
    %81 = math.absf %61 : vector<64x16xf32>
    %82 = vector.shape_cast %81 : vector<64x16xf32> to vector<4x16x16xf32>
    %83 = vector.shape_cast %72 : vector<16x16xf32> to vector<1x16x16xf32>
    %84 = vector.broadcast %83 : vector<1x16x16xf32> to vector<4x16x16xf32>
    %85 = arith.mulf %82, %84 : vector<4x16x16xf32>
    %86 = vector.shape_cast %85 : vector<4x16x16xf32> to vector<1x4x16x16xf32>
    %cst_41 = arith.constant dense<0.000000e+00> : vector<1xf32>
    %87 = vector.multi_reduction <add>, %86, %cst_41 [1, 2, 3] : vector<1x4x16x16xf32> to vector<1xf32>
    %88 = vector.shape_cast %87 : vector<1xf32> to vector<1x1x1x1xf32>
    %89 = vector.extract %88[0, 0, 0, 0] : f32 from vector<1x1x1x1xf32>
    %90 = math.absf %63 : vector<64x16xf32>
    %91 = vector.shape_cast %90 : vector<64x16xf32> to vector<4x16x16xf32>
    %92 = vector.shape_cast %80 : vector<16x16xf32> to vector<1x16x16xf32>
    %93 = vector.broadcast %92 : vector<1x16x16xf32> to vector<4x16x16xf32>
    %94 = arith.mulf %91, %93 : vector<4x16x16xf32>
    %95 = vector.shape_cast %94 : vector<4x16x16xf32> to vector<1x4x16x16xf32>
    %cst_42 = arith.constant dense<0.000000e+00> : vector<1xf32>
    %96 = vector.multi_reduction <add>, %95, %cst_42 [1, 2, 3] : vector<1x4x16x16xf32> to vector<1xf32>
    %97 = vector.shape_cast %96 : vector<1xf32> to vector<1x1x1x1xf32>
    %98 = vector.extract %97[0, 0, 0, 0] : f32 from vector<1x1x1x1xf32>
    %99 = arith.subf %6, %8 : vector<64x16xf32>
    %100 = math.absf %99 : vector<64x16xf32>
    %101 = vector.shape_cast %100 : vector<64x16xf32> to vector<1x64x16xf32>
    %cst_43 = arith.constant dense<0.000000e+00> : vector<1xf32>
    %102 = vector.multi_reduction <add>, %101, %cst_43 [1, 2] : vector<1x64x16xf32> to vector<1xf32>
    %103 = vector.shape_cast %102 : vector<1xf32> to vector<1x1x1xf32>
    %104 = vector.extract %103[0, 0, 0] : f32 from vector<1x1x1xf32>
    %cst_44 = arith.constant -9.765625E-4 : f32
    %105 = arith.mulf %cst_44, %60 : f32
    %cst_45 = arith.constant 5.2083336E-4 : f32
    %106 = arith.mulf %cst_45, %89 : f32
    %107 = arith.addf %105, %106 : f32
    %cst_46 = arith.constant 5.2083336E-4 : f32
    %108 = arith.mulf %cst_46, %98 : f32
    %109 = arith.addf %107, %108 : f32
    %cst_47 = arith.constant 4.88281273E-7 : f32
    %110 = arith.mulf %cst_47, %104 : f32
    %111 = arith.addf %109, %110 : f32
    %112 = vector.broadcast %111 : f32 to vector<1x8x128xf32>
    %c0_48 = arith.constant 0 : index
    %c0_49 = arith.constant 0 : index
    %c0_50 = arith.constant 0 : index
    %113 = vector.load %arg9[%c0_48, %c0_49, %c0_50] : memref<1x8x128xf32, #tpu.memory_space<vmem>>, vector<1x8x128xf32>
    tpu.vector_store %arg9[%c0_48, %c0_49, %c0_50], %112 {strides = array<i32>} : memref<1x8x128xf32, #tpu.memory_space<vmem>>, vector<1x8x128xf32>,
    return
  }
  func.func @transform_0(%arg0: i32) -> (i32, i32) {
    %c0_i32 = arith.constant 0 : i32
    %c0_i32_0 = arith.constant 0 : i32
    %c0_i32_1 = arith.constant 0 : i32
    return %c0_i32, %c0_i32_0 : i32, i32
  }
  func.func @transform_1(%arg0: i32) -> (i32, i32) {
    %c0_i32 = arith.constant 0 : i32
    %c0_i32_0 = arith.constant 0 : i32
    %c0_i32_1 = arith.constant 0 : i32
    return %c0_i32, %c0_i32_0 : i32, i32
  }
  func.func @transform_2(%arg0: i32) -> (i32, i32) {
    %c0_i32 = arith.constant 0 : i32
    %c0_i32_0 = arith.constant 0 : i32
    %c0_i32_1 = arith.constant 0 : i32
    return %c0_i32, %c0_i32_0 : i32, i32
  }
  func.func @transform_3(%arg0: i32) -> (i32, i32) {
    %c0_i32 = arith.constant 0 : i32
    %c0_i32_0 = arith.constant 0 : i32
    %c0_i32_1 = arith.constant 0 : i32
    return %c0_i32, %c0_i32_0 : i32, i32
  }
  func.func @transform_4(%arg0: i32) -> (i32, i32) {
    %c0_i32 = arith.constant 0 : i32
    %c0_i32_0 = arith.constant 0 : i32
    %c0_i32_1 = arith.constant 0 : i32
    return %c0_i32, %c0_i32_0 : i32, i32
  }
  func.func @transform_5(%arg0: i32) -> (i32, i32, i32) {
    %c0_i32 = arith.constant 0 : i32
    %c0_i32_0 = arith.constant 0 : i32
    %c0_i32_1 = arith.constant 0 : i32
    return %arg0, %c0_i32, %c0_i32_0 : i32, i32, i32
  }
  func.func @transform_6(%arg0: i32) -> (i32, i32, i32) {
    %c0_i32 = arith.constant 0 : i32
    %c0_i32_0 = arith.constant 0 : i32
    %c0_i32_1 = arith.constant 0 : i32
    return %arg0, %c0_i32, %c0_i32_0 : i32, i32, i32
  }
  func.func @transform_7(%arg0: i32) -> (i32, i32, i32) {
    %c0_i32 = arith.constant 0 : i32
    %c0_i32_0 = arith.constant 0 : i32
    %c0_i32_1 = arith.constant 0 : i32
    return %arg0, %c0_i32, %c0_i32_0 : i32, i32, i32
  }
  func.func @transform_8(%arg0: i32) -> (i32, i32, i32) {
    %c0_i32 = arith.constant 0 : i32
    %c0_i32_0 = arith.constant 0 : i32
    %c0_i32_1 = arith.constant 0 : i32
    return %arg0, %c0_i32, %c0_i32_0 : i32, i32, i32
  }
}

</mosaic_0001>

<llo_original>
// kernel: tpu_custom_call.1
$region0: #{tpu_custom_call.1}
  #allocation0 [shape = 'u32[]', space=smem, size = 0x4, offset = 0x4, fixed_abs, tag = 'smem constant byte address 0x4 - core index']
  #allocation1 [shape = 'u32[72,128]{1,0:T(1,128)}', space=vmem, size = 0x9000, scoped, tag = 'internal scratch']
  %s0 = inlined_call_operand.vmem [shape: f32[16,16], index: 0, kind: input, shape index: {}]
  %s1 = inlined_call_operand.vmem [shape: f32[64,64], index: 1, kind: input, shape index: {}]
  %s2 = inlined_call_operand.vmem [shape: f32[16,16], index: 2, kind: input, shape index: {}]
  %s3 = inlined_call_operand.vmem [shape: f32[64,64], index: 3, kind: input, shape index: {}]
  %s4 = inlined_call_operand.vmem [shape: f32[64,64], index: 4, kind: input, shape index: {}]
  %s5 = inlined_call_operand.vmem [shape: f32[2,64,16], index: 5, kind: input, shape index: {}]
  %s6 = inlined_call_operand.vmem [shape: f32[2,64,16], index: 6, kind: input, shape index: {}]
  %s7 = inlined_call_operand.vmem [shape: f32[2,64,16], index: 7, kind: input, shape index: {}]
  %s8 = inlined_call_operand.hbm [shape: f32[2,8,128], index: 8, kind: output, shape index: {}]
  %s9 = sld [smem:[#allocation0]]
  $region65: #{tpu_custom_call.1} parent=0
    _
  %s11 = ssub.s32 1, %s9
  %s12 = scalar_select 0, %s11, %s9
  $region1: #{tpu_custom_call.1} parent=0
    #allocation2 [shape = 'u8[8192]{0}', space=vmem, size = 0x2000, scoped, tag = 'output window, operand 0']
    #allocation3 [shape = 's32[2]{0}', space=sflag, size = 0x8, scoped, tag = 'scoped memory for tpu_custom_call.1']
    %13 = vsyncpa [#allocation3], 0
    %s14 = scalar_lea.sflag [#allocation3], 1
    %15 = vsyncpa %s14, 0
    loop: start=0, step=1, limit=4
    $region2: #{tpu_custom_call.1} parent=1 // loop_pre_header
      _
    $region3: #{tpu_custom_call.1} parent=1 // loop_header
      %s17 = sphi 0, %s21
      %p18 = scmp.ge.s32.totalorder %s17, 4
      %s25 = sphi 0, %s25
      %s27 = sphi 0, %s25
      %s28 = sphi 0, %s27
      %s42 = sphi 0, %s28
      %s46 = sphi 0, %s46
      %s48 = sphi 0, %s46
      %s49 = sphi 0, %s48
      %s63 = sphi 0, %s49
      %s67 = sphi 0, %s67
      %s69 = sphi 0, %s67
      %s70 = sphi 0, %s69
      %s84 = sphi 0, %s70
      %s88 = sphi 0, %s88
      %s90 = sphi 0, %s88
      %s91 = sphi 0, %s90
      %s105 = sphi 0, %s91
      %s109 = sphi 0, %s109
      %s111 = sphi 0, %s109
      %s112 = sphi 0, %s111
      %s126 = sphi 0, %s112
      %s132 = sphi 0, %s134
      %s135 = sphi 0, %s132
      %s136 = sphi 0, %s135
      %s152 = sphi 0, %s136
      %s158 = sphi 0, %s160
      %s161 = sphi 0, %s158
      %s162 = sphi 0, %s161
      %s178 = sphi 0, %s162
      %s184 = sphi 0, %s186
      %s187 = sphi 0, %s184
      %s188 = sphi 0, %s187
      %s204 = sphi 0, %s188
      %s210 = sphi 0, %s212
      %s213 = sphi 0, %s210
      %s214 = sphi 0, %s213
      %s230 = sphi 0, %s214
    $region4: #{tpu_custom_call.1} parent=1 // loop_header_branch
      %20 = sbr.rel (%p18) target = $region8
    $region5: #{tpu_custom_call.1} parent=1 // loop_body
      %s22 = ssub.s32 %s17, 1
      %s23 = ssub.s32 %s17, 2
      %s24 = sadd.s32 %s17, 1
      %s26 = sadd.s32 %s25, 1
      %p29 = scmp.eq.s32.totalorder %s17, 1
      %p30 = scmp.ne.s32.totalorder %s25, %s27
      %p31 = scmp.eq.s32.totalorder %s17, 0
      %p32 = por %p30, %p31
      %p33 = scmp.ne.s32.totalorder %s25, %s27
      %p34 = scmp.eq.s32.totalorder %s22, 1
      %p35 = por %p33, %p34
      %p36 = scmp.ne.s32.totalorder %s27, %s28
      %p37 = scmp.eq.s32.totalorder %s22, 0
      %p38 = por %p36, %p37
      %p39 = scmp.ne.s32.totalorder %s27, %s28
      %p40 = scmp.eq.s32.totalorder %s23, 1
      %p41 = por %p39, %p40
      %p43 = scmp.ne.s32.totalorder %s28, %s42
      %p44 = scmp.eq.s32.totalorder %s23, 0
      %p45 = por %p43, %p44
      %s47 = sadd.s32 %s46, 1
      %p50 = scmp.eq.s32.totalorder %s17, 1
      %p51 = scmp.ne.s32.totalorder %s46, %s48
      %p52 = scmp.eq.s32.totalorder %s17, 0
      %p53 = por %p51, %p52
      %p54 = scmp.ne.s32.totalorder %s46, %s48
      %p55 = scmp.eq.s32.totalorder %s22, 1
      %p56 = por %p54, %p55
      %p57 = scmp.ne.s32.totalorder %s48, %s49
      %p58 = scmp.eq.s32.totalorder %s22, 0
      %p59 = por %p57, %p58
      %p60 = scmp.ne.s32.totalorder %s48, %s49
      %p61 = scmp.eq.s32.totalorder %s23, 1
      %p62 = por %p60, %p61
      %p64 = scmp.ne.s32.totalorder %s49, %s63
      %p65 = scmp.eq.s32.totalorder %s23, 0
      %p66 = por %p64, %p65
      %s68 = sadd.s32 %s67, 1
      %p71 = scmp.eq.s32.totalorder %s17, 1
      %p72 = scmp.ne.s32.totalorder %s67, %s69
      %p73 = scmp.eq.s32.totalorder %s17, 0
      %p74 = por %p72, %p73
      %p75 = scmp.ne.s32.totalorder %s67, %s69
      %p76 = scmp.eq.s32.totalorder %s22, 1
      %p77 = por %p75, %p76
      %p78 = scmp.ne.s32.totalorder %s69, %s70
      %p79 = scmp.eq.s32.totalorder %s22, 0
      %p80 = por %p78, %p79
      %p81 = scmp.ne.s32.totalorder %s69, %s70
      %p82 = scmp.eq.s32.totalorder %s23, 1
      %p83 = por %p81, %p82
      %p85 = scmp.ne.s32.totalorder %s70, %s84
      %p86 = scmp.eq.s32.totalorder %s23, 0
      %p87 = por %p85, %p86
      %s89 = sadd.s32 %s88, 1
      %p92 = scmp.eq.s32.totalorder %s17, 1
      %p93 = scmp.ne.s32.totalorder %s88, %s90
      %p94 = scmp.eq.s32.totalorder %s17, 0
      %p95 = por %p93, %p94
      %p96 = scmp.ne.s32.totalorder %s88, %s90
      %p97 = scmp.eq.s32.totalorder %s22, 1
      %p98 = por %p96, %p97
      %p99 = scmp.ne.s32.totalorder %s90, %s91
      %p100 = scmp.eq.s32.totalorder %s22, 0
      %p101 = por %p99, %p100
      %p102 = scmp.ne.s32.totalorder %s90, %s91
      %p103 = scmp.eq.s32.totalorder %s23, 1
      %p104 = por %p102, %p103
      %p106 = scmp.ne.s32.totalorder %s91, %s105
      %p107 = scmp.eq.s32.totalorder %s23, 0
      %p108 = por %p106, %p107
      %s110 = sadd.s32 %s109, 1
      %p113 = scmp.eq.s32.totalorder %s17, 1
      %p114 = scmp.ne.s32.totalorder %s109, %s111
      %p115 = scmp.eq.s32.totalorder %s17, 0
      %p116 = por %p114, %p115
      %p117 = scmp.ne.s32.totalorder %s109, %s111
      %p118 = scmp.eq.s32.totalorder %s22, 1
      %p119 = por %p117, %p118
      %p120 = scmp.ne.s32.totalorder %s111, %s112
      %p121 = scmp.eq.s32.totalorder %s22, 0
      %p122 = por %p120, %p121
      %p123 = scmp.ne.s32.totalorder %s111, %s112
      %p124 = scmp.eq.s32.totalorder %s23, 1
      %p125 = por %p123, %p124
      %p127 = scmp.ne.s32.totalorder %s112, %s126
      %p128 = scmp.eq.s32.totalorder %s23, 0
      %p129 = por %p127, %p128
      %s130 = ssub.s32 %s17, %s24
      %p131 = scmp.eq.s32.totalorder %s130, 0
      %s133 = sadd.s32 %s132, 1
      %s134 = scalar_select %p131, %s132, %s133
      %p137 = pneg %p131
      %p138 = scmp.eq.s32.totalorder %s17, 1
      %p139 = por %p137, %p138
      %p140 = scmp.ne.s32.totalorder %s132, %s135
      %p141 = scmp.eq.s32.totalorder %s17, 0
      %p142 = por %p140, %p141
      %p143 = scmp.ne.s32.totalorder %s132, %s135
      %p144 = scmp.eq.s32.totalorder %s22, 1
      %p145 = por %p143, %p144
      %p146 = scmp.ne.s32.totalorder %s135, %s136
      %p147 = scmp.eq.s32.totalorder %s22, 0
      %p148 = por %p146, %p147
      %p149 = scmp.ne.s32.totalorder %s135, %s136
      %p150 = scmp.eq.s32.totalorder %s23, 1
      %p151 = por %p149, %p150
      %p153 = scmp.ne.s32.totalorder %s136, %s152
      %p154 = scmp.eq.s32.totalorder %s23, 0
      %p155 = por %p153, %p154
      %s156 = ssub.s32 %s17, %s24
      %p157 = scmp.eq.s32.totalorder %s156, 0
      %s159 = sadd.s32 %s158, 1
      %s160 = scalar_select %p157, %s158, %s159
      %p163 = pneg %p157
      %p164 = scmp.eq.s32.totalorder %s17, 1
      %p165 = por %p163, %p164
      %p166 = scmp.ne.s32.totalorder %s158, %s161
      %p167 = scmp.eq.s32.totalorder %s17, 0
      %p168 = por %p166, %p167
      %p169 = scmp.ne.s32.totalorder %s158, %s161
      %p170 = scmp.eq.s32.totalorder %s22, 1
      %p171 = por %p169, %p170
      %p172 = scmp.ne.s32.totalorder %s161, %s162
      %p173 = scmp.eq.s32.totalorder %s22, 0
      %p174 = por %p172, %p173
      %p175 = scmp.ne.s32.totalorder %s161, %s162
      %p176 = scmp.eq.s32.totalorder %s23, 1
      %p177 = por %p175, %p176
      %p179 = scmp.ne.s32.totalorder %s162, %s178
      %p180 = scmp.eq.s32.totalorder %s23, 0
      %p181 = por %p179, %p180
      %s182 = ssub.s32 %s17, %s24
      %p183 = scmp.eq.s32.totalorder %s182, 0
      %s185 = sadd.s32 %s184, 1
      %s186 = scalar_select %p183, %s184, %s185
      %p189 = pneg %p183
      %p190 = scmp.eq.s32.totalorder %s17, 1
      %p191 = por %p189, %p190
      %p192 = scmp.ne.s32.totalorder %s184, %s187
      %p193 = scmp.eq.s32.totalorder %s17, 0
      %p194 = por %p192, %p193
      %p195 = scmp.ne.s32.totalorder %s184, %s187
      %p196 = scmp.eq.s32.totalorder %s22, 1
      %p197 = por %p195, %p196
      %p198 = scmp.ne.s32.totalorder %s187, %s188
      %p199 = scmp.eq.s32.totalorder %s22, 0
      %p200 = por %p198, %p199
      %p201 = scmp.ne.s32.totalorder %s187, %s188
      %p202 = scmp.eq.s32.totalorder %s23, 1
      %p203 = por %p201, %p202
      %p205 = scmp.ne.s32.totalorder %s188, %s204
      %p206 = scmp.eq.s32.totalorder %s23, 0
      %p207 = por %p205, %p206
      %s208 = ssub.s32 %s17, %s24
      %p209 = scmp.eq.s32.totalorder %s208, 0
      %s211 = sadd.s32 %s210, 1
      %s212 = scalar_select %p209, %s210, %s211
      %p215 = pneg %p209
      %p216 = scmp.eq.s32.totalorder %s17, 1
      %p217 = por %p215, %p216
      %p218 = scmp.ne.s32.totalorder %s210, %s213
      %p219 = scmp.eq.s32.totalorder %s17, 0
      %p220 = por %p218, %p219
      %p221 = scmp.ne.s32.totalorder %s210, %s213
      %p222 = scmp.eq.s32.totalorder %s22, 1
      %p223 = por %p221, %p222
      %p224 = scmp.ne.s32.totalorder %s213, %s214
      %p225 = scmp.eq.s32.totalorder %s22, 0
      %p226 = por %p224, %p225
      %p227 = scmp.ne.s32.totalorder %s213, %s214
      %p228 = scmp.eq.s32.totalorder %s23, 1
      %p229 = por %p227, %p228
      %p231 = scmp.ne.s32.totalorder %s214, %s230
      %p232 = scmp.eq.s32.totalorder %s23, 0
      %p233 = por %p231, %p232
      %p234 = scmp.le.s32.totalorder 1, %s17
      %p235 = scmp.lt.s32.totalorder %s17, 3
      %p236 = pnand %p234, %p235
      %p237 = pneg %p236
      // Predicated region
      $region9: #{tpu_custom_call.1} parent=5 // pred_check
        _
      $region10: #{tpu_custom_call.1} parent=5 // pred_check_branch
        %239 = sbr.rel (%p236) target = $region12
      $region11: #{tpu_custom_call.1} parent=5 // pred_region
        %s240 = ssub.s32 %s17, 1
        // Predicated region
        $region13: #{tpu_custom_call.1} parent=11 // pred_check
          %p241 = pneg %p38
        $region14: #{tpu_custom_call.1} parent=11 // pred_check_branch
          %243 = sbr.rel (%p241) target = $region16
        $region15: #{tpu_custom_call.1} parent=11 // pred_region
          _
        $region16: #{tpu_custom_call.1} parent=11 // pred_fallthru
          _
        // Predicated region
        $region17: #{tpu_custom_call.1} parent=11 // pred_check
          %p244 = pneg %p59
        $region18: #{tpu_custom_call.1} parent=11 // pred_check_branch
          %246 = sbr.rel (%p244) target = $region20
        $region19: #{tpu_custom_call.1} parent=11 // pred_region
          _
        $region20: #{tpu_custom_call.1} parent=11 // pred_fallthru
          _
        // Predicated region
        $region21: #{tpu_custom_call.1} parent=11 // pred_check
          %p247 = pneg %p80
        $region22: #{tpu_custom_call.1} parent=11 // pred_check_branch
          %249 = sbr.rel (%p247) target = $region24
        $region23: #{tpu_custom_call.1} parent=11 // pred_region
          _
        $region24: #{tpu_custom_call.1} parent=11 // pred_fallthru
          _
        // Predicated region
        $region25: #{tpu_custom_call.1} parent=11 // pred_check
          %p250 = pneg %p101
        $region26: #{tpu_custom_call.1} parent=11 // pred_check_branch
          %252 = sbr.rel (%p250) target = $region28
        $region27: #{tpu_custom_call.1} parent=11 // pred_region
          _
        $region28: #{tpu_custom_call.1} parent=11 // pred_fallthru
          _
        // Predicated region
        $region29: #{tpu_custom_call.1} parent=11 // pred_check
          %p253 = pneg %p122
        $region30: #{tpu_custom_call.1} parent=11 // pred_check_branch
          %255 = sbr.rel (%p253) target = $region32
        $region31: #{tpu_custom_call.1} parent=11 // pred_region
          _
        $region32: #{tpu_custom_call.1} parent=11 // pred_fallthru
          _
      $region12: #{tpu_custom_call.1} parent=5 // pred_fallthru
        _
      %p256 = scmp.lt.s32.totalorder %s17, 2
      // Predicated region
      $region33: #{tpu_custom_call.1} parent=5 // pred_check
        %p257 = pneg %p256
      $region34: #{tpu_custom_call.1} parent=5 // pred_check_branch
        %259 = sbr.rel (%p257) target = $region36
      $region35: #{tpu_custom_call.1} parent=5 // pred_region
        // Predicated region
        $region37: #{tpu_custom_call.1} parent=35 // pred_check
          %p260 = pneg %p142
        $region38: #{tpu_custom_call.1} parent=35 // pred_check_branch
          %262 = sbr.rel (%p260) target = $region40
        $region39: #{tpu_custom_call.1} parent=35 // pred_region
          %p263 = scmp.lt.s32.totalorder %s17, 1
          %s264 = scalar_select %p263, %s17, 1
          %s265 = smul.addr %s264, 8
          %s266 = smul.addr %s265, 8
          %s267 = scalar_lea.vmem %s5, %s266
        $region40: #{tpu_custom_call.1} parent=35 // pred_fallthru
          _
        // Predicated region
        $region41: #{tpu_custom_call.1} parent=35 // pred_check
          %p268 = pneg %p168
        $region42: #{tpu_custom_call.1} parent=35 // pred_check_branch
          %270 = sbr.rel (%p268) target = $region44
        $region43: #{tpu_custom_call.1} parent=35 // pred_region
          %p271 = scmp.lt.s32.totalorder %s17, 1
          %s272 = scalar_select %p271, %s17, 1
          %s273 = smul.addr %s272, 8
          %s274 = smul.addr %s273, 8
          %s275 = scalar_lea.vmem %s6, %s274
        $region44: #{tpu_custom_call.1} parent=35 // pred_fallthru
          _
        // Predicated region
        $region45: #{tpu_custom_call.1} parent=35 // pred_check
          %p276 = pneg %p194
        $region46: #{tpu_custom_call.1} parent=35 // pred_check_branch
          %278 = sbr.rel (%p276) target = $region48
        $region47: #{tpu_custom_call.1} parent=35 // pred_region
          %p279 = scmp.lt.s32.totalorder %s17, 1
          %s280 = scalar_select %p279, %s17, 1
          %s281 = smul.addr %s280, 8
          %s282 = smul.addr %s281, 8
          %s283 = scalar_lea.vmem %s7, %s282
        $region48: #{tpu_custom_call.1} parent=35 // pred_fallthru
          _
      $region36: #{tpu_custom_call.1} parent=5 // pred_fallthru
        _
      %p284 = scmp.le.s32.totalorder 1, %s17
      %p285 = scmp.lt.s32.totalorder %s17, 3
      %p286 = pnand %p284, %p285
      %p287 = pneg %p286
      // Predicated region
      $region49: #{tpu_custom_call.1} parent=5 // pred_check
        _
      $region50: #{tpu_custom_call.1} parent=5 // pred_check_branch
        %289 = sbr.rel (%p286) target = $region52
      $region51: #{tpu_custom_call.1} parent=5 // pred_region
        %s290 = ssub.s32 %s17, 1
        %p291 = pneg %p38
        %p292 = pneg %p35
        %p293 = pneg %p59
        %p294 = pneg %p56
        %p295 = pneg %p80
        %p296 = pneg %p77
        %p297 = pneg %p101
        %p298 = pneg %p98
        %p299 = pneg %p122
        %p300 = pneg %p119
        %p301 = scmp.lt.s32.totalorder %s22, 1
        %s302 = scalar_select %p301, %s22, 1
        %s303 = smul.addr %s302, 8
        %s304 = smul.addr %s303, 8
        %s305 = scalar_lea.vmem %s5, %s304
        %p306 = pneg %p148
        %p307 = pneg %p145
        %p308 = scmp.lt.s32.totalorder %s22, 1
        %s309 = scalar_select %p308, %s22, 1
        %s310 = smul.addr %s309, 8
        %s311 = smul.addr %s310, 8
        %s312 = scalar_lea.vmem %s6, %s311
        %p313 = pneg %p174
        %p314 = pneg %p171
        %p315 = scmp.lt.s32.totalorder %s22, 1
        %s316 = scalar_select %p315, %s22, 1
        %s317 = smul.addr %s316, 8
        %s318 = smul.addr %s317, 8
        %s319 = scalar_lea.vmem %s7, %s318
        %p320 = pneg %p200
        %p321 = pneg %p197
        %p322 = pneg %p226
        %p323 = pneg %p223
        %s324 = sand.u32 %s213, 1
        %s325 = scalar_lea.sflag [#allocation3], %s324
        %s326 = sand.u32 %s213, 1
        %s327 = smul.addr %s326, 8
        %s328 = scalar_lea.vmem [#allocation2], %s327
        %p329 = scmp.lt.s32.totalorder %s22, 1
        %s330 = scalar_select %p329, %s22, 1
        %s331 = smul.addr %s330, 8
        %s332 = smul.addr %s331, 8
        %s333 = scalar_lea.vmem %s5, %s332
        %p334 = scmp.lt.s32.totalorder %s22, 1
        %s335 = scalar_select %p334, %s22, 1
        %s336 = smul.addr %s335, 8
        %s337 = smul.addr %s336, 8
        %s338 = scalar_lea.vmem %s6, %s337
        %p339 = scmp.lt.s32.totalorder %s22, 1
        %s340 = scalar_select %p339, %s22, 1
        %s341 = smul.addr %s340, 8
        %s342 = smul.addr %s341, 8
        %s343 = scalar_lea.vmem %s7, %s342
        %v344 = vld [vmem:[%s0] sm:$0xff]
        %v345 = vld [vmem:[%s0 + $0x8] sm:$0xff]
        %v346 = vld [vmem:[%s1] sm:$0xff]
        %v347 = vld [vmem:[%s1 + $0x8] sm:$0xff]
        %v348 = vld [vmem:[%s1 + $0x10] sm:$0xff]
        %v349 = vld [vmem:[%s1 + $0x18] sm:$0xff]
        %v350 = vld [vmem:[%s1 + $0x20] sm:$0xff]
        %v351 = vld [vmem:[%s1 + $0x28] sm:$0xff]
        %v352 = vld [vmem:[%s1 + $0x30] sm:$0xff]
        %v353 = vld [vmem:[%s1 + $0x38] sm:$0xff]
        %v354 = vld [vmem:[%s2] sm:$0xff]
        %v355 = vld [vmem:[%s2 + $0x8] sm:$0xff]
        %v356 = vld [vmem:[%s3] sm:$0xff]
        %v357 = vld [vmem:[%s3 + $0x8] sm:$0xff]
        %v358 = vld [vmem:[%s3 + $0x10] sm:$0xff]
        %v359 = vld [vmem:[%s3 + $0x18] sm:$0xff]
        %v360 = vld [vmem:[%s3 + $0x20] sm:$0xff]
        %v361 = vld [vmem:[%s3 + $0x28] sm:$0xff]
        %v362 = vld [vmem:[%s3 + $0x30] sm:$0xff]
        %v363 = vld [vmem:[%s3 + $0x38] sm:$0xff]
        %v364 = vld [vmem:[%s4] sm:$0xff]
        %v365 = vld [vmem:[%s4 + $0x8] sm:$0xff]
        %v366 = vld [vmem:[%s4 + $0x10] sm:$0xff]
        %v367 = vld [vmem:[%s4 + $0x18] sm:$0xff]
        %v368 = vld [vmem:[%s4 + $0x20] sm:$0xff]
        %v369 = vld [vmem:[%s4 + $0x28] sm:$0xff]
        %v370 = vld [vmem:[%s4 + $0x30] sm:$0xff]
        %v371 = vld [vmem:[%s4 + $0x38] sm:$0xff]
        %v372 = vld [vmem:[%s333] sm:$0xff]
        %v373 = vld [vmem:[%s333 + $0x8] sm:$0xff]
        %v374 = vld [vmem:[%s333 + $0x10] sm:$0xff]
        %v375 = vld [vmem:[%s333 + $0x18] sm:$0xff]
        %v376 = vld [vmem:[%s333 + $0x20] sm:$0xff]
        %v377 = vld [vmem:[%s333 + $0x28] sm:$0xff]
        %v378 = vld [vmem:[%s333 + $0x30] sm:$0xff]
        %v379 = vld [vmem:[%s333 + $0x38] sm:$0xff]
        %v380 = vld [vmem:[%s338] sm:$0xff]
        %v381 = vld [vmem:[%s338 + $0x8] sm:$0xff]
        %v382 = vld [vmem:[%s338 + $0x10] sm:$0xff]
        %v383 = vld [vmem:[%s338 + $0x18] sm:$0xff]
        %v384 = vld [vmem:[%s338 + $0x20] sm:$0xff]
        %v385 = vld [vmem:[%s338 + $0x28] sm:$0xff]
        %v386 = vld [vmem:[%s338 + $0x30] sm:$0xff]
        %v387 = vld [vmem:[%s338 + $0x38] sm:$0xff]
        %v388 = vld [vmem:[%s343] sm:$0xff]
        %v389 = vld [vmem:[%s343 + $0x8] sm:$0xff]
        %v390 = vld [vmem:[%s343 + $0x10] sm:$0xff]
        %v391 = vld [vmem:[%s343 + $0x18] sm:$0xff]
        %v392 = vld [vmem:[%s343 + $0x20] sm:$0xff]
        %v393 = vld [vmem:[%s343 + $0x28] sm:$0xff]
        %v394 = vld [vmem:[%s343 + $0x30] sm:$0xff]
        %v395 = vld [vmem:[%s343 + $0x38] sm:$0xff]
        %v396 = vmul.f32 %v372, %v372
        %v397 = vmul.f32 %v373, %v373
        %v398 = vmul.f32 %v374, %v374
        %v399 = vmul.f32 %v375, %v375
        %v400 = vmul.f32 %v376, %v376
        %v401 = vmul.f32 %v377, %v377
        %v402 = vmul.f32 %v378, %v378
        %v403 = vmul.f32 %v379, %v379
        %v404 = vmul.f32 %v380, %v380
        %v405 = vmul.f32 %v381, %v381
        %v406 = vmul.f32 %v382, %v382
        %v407 = vmul.f32 %v383, %v383
        %v408 = vmul.f32 %v384, %v384
        %v409 = vmul.f32 %v385, %v385
        %v410 = vmul.f32 %v386, %v386
        %v411 = vmul.f32 %v387, %v387
        %v412 = vmul.f32 %v372, %v380
        %v413 = vmul.f32 %v373, %v381
        %v414 = vmul.f32 %v374, %v382
        %v415 = vmul.f32 %v375, %v383
        %v416 = vmul.f32 %v376, %v384
        %v417 = vmul.f32 %v377, %v385
        %v418 = vmul.f32 %v378, %v386
        %v419 = vmul.f32 %v379, %v387
        %vm420 = vcmask 130048
        %v422 = vsel %vm420, %v372, 0
        %v425 = vsel %vm420, %v373, 0
        %v428 = vsel %vm420, %v374, 0
        %v431 = vsel %vm420, %v375, 0
        %v434 = vsel %vm420, %v376, 0
        %v437 = vsel %vm420, %v377, 0
        %v440 = vsel %vm420, %v378, 0
        %v443 = vsel %vm420, %v379, 0
        %v446 = vsel %vm420, %v380, 0
        %v449 = vsel %vm420, %v381, 0
        %v452 = vsel %vm420, %v382, 0
        %v455 = vsel %vm420, %v383, 0
        %v458 = vsel %vm420, %v384, 0
        %v461 = vsel %vm420, %v385, 0
        %v464 = vsel %vm420, %v386, 0
        %v467 = vsel %vm420, %v387, 0
        %v470 = vsel %vm420, %v396, 0
        %v473 = vsel %vm420, %v397, 0
        %v476 = vsel %vm420, %v398, 0
        %v479 = vsel %vm420, %v399, 0
        %v482 = vsel %vm420, %v400, 0
        %v485 = vsel %vm420, %v401, 0
        %v488 = vsel %vm420, %v402, 0
        %v491 = vsel %vm420, %v403, 0
        %v494 = vsel %vm420, %v404, 0
        %v497 = vsel %vm420, %v405, 0
        %v500 = vsel %vm420, %v406, 0
        %v503 = vsel %vm420, %v407, 0
        %v506 = vsel %vm420, %v408, 0
        %v509 = vsel %vm420, %v409, 0
        %v512 = vsel %vm420, %v410, 0
        %v515 = vsel %vm420, %v411, 0
        %v518 = vsel %vm420, %v412, 0
        %v521 = vsel %vm420, %v413, 0
        %v524 = vsel %vm420, %v414, 0
        %v527 = vsel %vm420, %v415, 0
        %v530 = vsel %vm420, %v416, 0
        %v533 = vsel %vm420, %v417, 0
        %v536 = vsel %vm420, %v418, 0
        %v539 = vsel %vm420, %v419, 0
        %541 = vmatpush.msra.mxu0 0.0
        %542 = vmatpush.msra.mxu0 0.0
        %543 = vmatpush.msra.mxu0 0.0
        %544 = vmatpush.msra.mxu0 0.0
        %545 = vmatpush.msra.mxu0 0.0
        %546 = vmatpush.msra.mxu0 0.0
        %547 = vmatpush.msra.mxu0 0.0
        %548 = vmatpush.msra.mxu0 0.0
        %549 = vmatpush.msra.mxu0 0.0
        %550 = vmatpush.msra.mxu0 0.0
        %551 = vmatpush.msra.mxu0 0.0
        %552 = vmatpush.msra.mxu0 0.0
        %553 = vmatpush.msra.mxu0 0.0
        %554 = vmatpush.msra.mxu0 0.0
        %555 = vmatpush.msra.mxu0 %v345
        %556 = vmatpush.msra.mxu0 %v344
        %557 = vmatmul.f32.gmra.mxu0 %v422
        %v558 = vpop.f32.mrf.mxu0
        %v559 = vadd.f32 0.0, %v558
        %560 = vmatmul.f32.gmra.mxu0 %v425
        %v561 = vpop.f32.mrf.mxu0
        %v562 = vadd.f32 0.0, %v561
        %563 = vmatmul.f32.gmra.mxu0 %v428
        %v564 = vpop.f32.mrf.mxu0
        %v565 = vadd.f32 0.0, %v564
        %566 = vmatmul.f32.gmra.mxu0 %v431
        %v567 = vpop.f32.mrf.mxu0
        %v568 = vadd.f32 0.0, %v567
        %569 = vmatmul.f32.gmra.mxu0 %v434
        %v570 = vpop.f32.mrf.mxu0
        %v571 = vadd.f32 0.0, %v570
        %572 = vmatmul.f32.gmra.mxu0 %v437
        %v573 = vpop.f32.mrf.mxu0
        %v574 = vadd.f32 0.0, %v573
        %575 = vmatmul.f32.gmra.mxu0 %v440
        %v576 = vpop.f32.mrf.mxu0
        %v577 = vadd.f32 0.0, %v576
        %578 = vmatmul.f32.gmra.mxu0 %v443
        %v579 = vpop.f32.mrf.mxu0
        %v580 = vadd.f32 0.0, %v579
        %581 = vmatmul.f32.gmra.mxu0 %v446
        %v582 = vpop.f32.mrf.mxu0
        %v583 = vadd.f32 0.0, %v582
        %584 = vmatmul.f32.gmra.mxu0 %v449
        %v585 = vpop.f32.mrf.mxu0
        %v586 = vadd.f32 0.0, %v585
        %587 = vmatmul.f32.gmra.mxu0 %v452
        %v588 = vpop.f32.mrf.mxu0
        %v589 = vadd.f32 0.0, %v588
        %590 = vmatmul.f32.gmra.mxu0 %v455
        %v591 = vpop.f32.mrf.mxu0
        %v592 = vadd.f32 0.0, %v591
        %593 = vmatmul.f32.gmra.mxu0 %v458
        %v594 = vpop.f32.mrf.mxu0
        %v595 = vadd.f32 0.0, %v594
        %596 = vmatmul.f32.gmra.mxu0 %v461
        %v597 = vpop.f32.mrf.mxu0
        %v598 = vadd.f32 0.0, %v597
        %599 = vmatmul.f32.gmra.mxu0 %v464
        %v600 = vpop.f32.mrf.mxu0
        %v601 = vadd.f32 0.0, %v600
        %602 = vmatmul.f32.gmra.mxu0 %v467
        %v603 = vpop.f32.mrf.mxu0
        %v604 = vadd.f32 0.0, %v603
        %605 = vmatmul.f32.gmra.mxu0 %v470
        %v606 = vpop.f32.mrf.mxu0
        %v607 = vadd.f32 0.0, %v606
        %608 = vmatmul.f32.gmra.mxu0 %v473
        %v609 = vpop.f32.mrf.mxu0
        %v610 = vadd.f32 0.0, %v609
        %611 = vmatmul.f32.gmra.mxu0 %v476
        %v612 = vpop.f32.mrf.mxu0
        %v613 = vadd.f32 0.0, %v612
        %614 = vmatmul.f32.gmra.mxu0 %v479
        %v615 = vpop.f32.mrf.mxu0
        %v616 = vadd.f32 0.0, %v615
        %617 = vmatmul.f32.gmra.mxu0 %v482
        %v618 = vpop.f32.mrf.mxu0
        %v619 = vadd.f32 0.0, %v618
        %620 = vmatmul.f32.gmra.mxu0 %v485
        %v621 = vpop.f32.mrf.mxu0
        %v622 = vadd.f32 0.0, %v621
        %623 = vmatmul.f32.gmra.mxu0 %v488
        %v624 = vpop.f32.mrf.mxu0
        %v625 = vadd.f32 0.0, %v624
        %626 = vmatmul.f32.gmra.mxu0 %v491
        %v627 = vpop.f32.mrf.mxu0
        %v628 = vadd.f32 0.0, %v627
        %629 = vmatmul.f32.gmra.mxu0 %v494
        %v630 = vpop.f32.mrf.mxu0
        %v631 = vadd.f32 0.0, %v630
        %632 = vmatmul.f32.gmra.mxu0 %v497
        %v633 = vpop.f32.mrf.mxu0
        %v634 = vadd.f32 0.0, %v633
        %635 = vmatmul.f32.gmra.mxu0 %v500
        %v636 = vpop.f32.mrf.mxu0
        %v637 = vadd.f32 0.0, %v636
        %638 = vmatmul.f32.gmra.mxu0 %v503
        %v639 = vpop.f32.mrf.mxu0
        %v640 = vadd.f32 0.0, %v639
        %641 = vmatmul.f32.gmra.mxu0 %v506
        %v642 = vpop.f32.mrf.mxu0
        %v643 = vadd.f32 0.0, %v642
        %644 = vmatmul.f32.gmra.mxu0 %v509
        %v645 = vpop.f32.mrf.mxu0
        %v646 = vadd.f32 0.0, %v645
        %647 = vmatmul.f32.gmra.mxu0 %v512
        %v648 = vpop.f32.mrf.mxu0
        %v649 = vadd.f32 0.0, %v648
        %650 = vmatmul.f32.gmra.mxu0 %v515
        %v651 = vpop.f32.mrf.mxu0
        %v652 = vadd.f32 0.0, %v651
        %653 = vmatmul.f32.gmra.mxu0 %v518
        %v654 = vpop.f32.mrf.mxu0
        %v655 = vadd.f32 0.0, %v654
        %656 = vmatmul.f32.gmra.mxu0 %v521
        %v657 = vpop.f32.mrf.mxu0
        %v658 = vadd.f32 0.0, %v657
        %659 = vmatmul.f32.gmra.mxu0 %v524
        %v660 = vpop.f32.mrf.mxu0
        %v661 = vadd.f32 0.0, %v660
        %662 = vmatmul.f32.gmra.mxu0 %v527
        %v663 = vpop.f32.mrf.mxu0
        %v664 = vadd.f32 0.0, %v663
        %665 = vmatmul.f32.gmra.mxu0 %v530
        %v666 = vpop.f32.mrf.mxu0
        %v667 = vadd.f32 0.0, %v666
        %668 = vmatmul.f32.gmra.mxu0 %v533
        %v669 = vpop.f32.mrf.mxu0
        %v670 = vadd.f32 0.0, %v669
        %671 = vmatmul.f32.gmra.mxu0 %v536
        %v672 = vpop.f32.mrf.mxu0
        %v673 = vadd.f32 0.0, %v672
        %674 = vmatmul.f32.gmra.mxu0 %v539
        %v675 = vpop.f32.mrf.mxu0
        %v676 = vadd.f32 0.0, %v675
        %677 = vdwg.mxu0
        %vm678 = vcmask 523264
        %v680 = vsel %vm678, %v346, 0
        %v683 = vsel %vm678, %v347, 0
        %v686 = vsel %vm678, %v348, 0
        %v689 = vsel %vm678, %v349, 0
        %v692 = vsel %vm678, %v350, 0
        %v695 = vsel %vm678, %v351, 0
        %v698 = vsel %vm678, %v352, 0
        %v701 = vsel %vm678, %v353, 0
        %703 = vmatpush.msra.mxu0 0.0
        %704 = vmatpush.msra.mxu0 0.0
        %705 = vmatpush.msra.mxu0 0.0
        %706 = vmatpush.msra.mxu0 0.0
        %707 = vmatpush.msra.mxu0 0.0
        %708 = vmatpush.msra.mxu0 0.0
        %709 = vmatpush.msra.mxu0 0.0
        %710 = vmatpush.msra.mxu0 0.0
        %711 = vmatpush.msra.mxu0 %v580
        %712 = vmatpush.msra.mxu0 %v577
        %713 = vmatpush.msra.mxu0 %v574
        %714 = vmatpush.msra.mxu0 %v571
        %715 = vmatpush.msra.mxu0 %v568
        %716 = vmatpush.msra.mxu0 %v565
        %717 = vmatpush.msra.mxu0 %v562
        %718 = vmatpush.msra.mxu0 %v559
        %719 = vmatmul.f32.gmra.mxu0 %v680
        %v720 = vpop.f32.mrf.mxu0
        %v721 = vadd.f32 0.0, %v720
        %722 = vmatmul.f32.gmra.mxu0 %v683
        %v723 = vpop.f32.mrf.mxu0
        %v724 = vadd.f32 0.0, %v723
        %725 = vmatmul.f32.gmra.mxu0 %v686
        %v726 = vpop.f32.mrf.mxu0
        %v727 = vadd.f32 0.0, %v726
        %728 = vmatmul.f32.gmra.mxu0 %v689
        %v729 = vpop.f32.mrf.mxu0
        %v730 = vadd.f32 0.0, %v729
        %731 = vmatmul.f32.gmra.mxu0 %v692
        %v732 = vpop.f32.mrf.mxu0
        %v733 = vadd.f32 0.0, %v732
        %734 = vmatmul.f32.gmra.mxu0 %v695
        %v735 = vpop.f32.mrf.mxu0
        %v736 = vadd.f32 0.0, %v735
        %737 = vmatmul.f32.gmra.mxu0 %v698
        %v738 = vpop.f32.mrf.mxu0
        %v739 = vadd.f32 0.0, %v738
        %740 = vmatmul.f32.gmra.mxu0 %v701
        %v741 = vpop.f32.mrf.mxu0
        %v742 = vadd.f32 0.0, %v741
        %743 = vdwg.mxu0
        %744 = vmatpush.msra.mxu0 0.0
        %745 = vmatpush.msra.mxu0 0.0
        %746 = vmatpush.msra.mxu0 0.0
        %747 = vmatpush.msra.mxu0 0.0
        %748 = vmatpush.msra.mxu0 0.0
        %749 = vmatpush.msra.mxu0 0.0
        %750 = vmatpush.msra.mxu0 0.0
        %751 = vmatpush.msra.mxu0 0.0
        %752 = vmatpush.msra.mxu0 %v604
        %753 = vmatpush.msra.mxu0 %v601
        %754 = vmatpush.msra.mxu0 %v598
        %755 = vmatpush.msra.mxu0 %v595
        %756 = vmatpush.msra.mxu0 %v592
        %757 = vmatpush.msra.mxu0 %v589
        %758 = vmatpush.msra.mxu0 %v586
        %759 = vmatpush.msra.mxu0 %v583
        %760 = vmatmul.f32.gmra.mxu0 %v680
        %v761 = vpop.f32.mrf.mxu0
        %v762 = vadd.f32 0.0, %v761
        %763 = vmatmul.f32.gmra.mxu0 %v683
        %v764 = vpop.f32.mrf.mxu0
        %v765 = vadd.f32 0.0, %v764
        %766 = vmatmul.f32.gmra.mxu0 %v686
        %v767 = vpop.f32.mrf.mxu0
        %v768 = vadd.f32 0.0, %v767
        %769 = vmatmul.f32.gmra.mxu0 %v689
        %v770 = vpop.f32.mrf.mxu0
        %v771 = vadd.f32 0.0, %v770
        %772 = vmatmul.f32.gmra.mxu0 %v692
        %v773 = vpop.f32.mrf.mxu0
        %v774 = vadd.f32 0.0, %v773
        %775 = vmatmul.f32.gmra.mxu0 %v695
        %v776 = vpop.f32.mrf.mxu0
        %v777 = vadd.f32 0.0, %v776
        %778 = vmatmul.f32.gmra.mxu0 %v698
        %v779 = vpop.f32.mrf.mxu0
        %v780 = vadd.f32 0.0, %v779
        %781 = vmatmul.f32.gmra.mxu0 %v701
        %v782 = vpop.f32.mrf.mxu0
        %v783 = vadd.f32 0.0, %v782
        %784 = vdwg.mxu0
        %785 = vmatpush.msra.mxu0 0.0
        %786 = vmatpush.msra.mxu0 0.0
        %787 = vmatpush.msra.mxu0 0.0
        %788 = vmatpush.msra.mxu0 0.0
        %789 = vmatpush.msra.mxu0 0.0
        %790 = vmatpush.msra.mxu0 0.0
        %791 = vmatpush.msra.mxu0 0.0
        %792 = vmatpush.msra.mxu0 0.0
        %793 = vmatpush.msra.mxu0 %v628
        %794 = vmatpush.msra.mxu0 %v625
        %795 = vmatpush.msra.mxu0 %v622
        %796 = vmatpush.msra.mxu0 %v619
        %797 = vmatpush.msra.mxu0 %v616
        %798 = vmatpush.msra.mxu0 %v613
        %799 = vmatpush.msra.mxu0 %v610
        %800 = vmatpush.msra.mxu0 %v607
        %801 = vmatmul.f32.gmra.mxu0 %v680
        %v802 = vpop.f32.mrf.mxu0
        %v803 = vadd.f32 0.0, %v802
        %804 = vmatmul.f32.gmra.mxu0 %v683
        %v805 = vpop.f32.mrf.mxu0
        %v806 = vadd.f32 0.0, %v805
        %807 = vmatmul.f32.gmra.mxu0 %v686
        %v808 = vpop.f32.mrf.mxu0
        %v809 = vadd.f32 0.0, %v808
        %810 = vmatmul.f32.gmra.mxu0 %v689
        %v811 = vpop.f32.mrf.mxu0
        %v812 = vadd.f32 0.0, %v811
        %813 = vmatmul.f32.gmra.mxu0 %v692
        %v814 = vpop.f32.mrf.mxu0
        %v815 = vadd.f32 0.0, %v814
        %816 = vmatmul.f32.gmra.mxu0 %v695
        %v817 = vpop.f32.mrf.mxu0
        %v818 = vadd.f32 0.0, %v817
        %819 = vmatmul.f32.gmra.mxu0 %v698
        %v820 = vpop.f32.mrf.mxu0
        %v821 = vadd.f32 0.0, %v820
        %822 = vmatmul.f32.gmra.mxu0 %v701
        %v823 = vpop.f32.mrf.mxu0
        %v824 = vadd.f32 0.0, %v823
        %825 = vdwg.mxu0
        %826 = vmatpush.msra.mxu0 0.0
        %827 = vmatpush.msra.mxu0 0.0
        %828 = vmatpush.msra.mxu0 0.0
        %829 = vmatpush.msra.mxu0 0.0
        %830 = vmatpush.msra.mxu0 0.0
        %831 = vmatpush.msra.mxu0 0.0
        %832 = vmatpush.msra.mxu0 0.0
        %833 = vmatpush.msra.mxu0 0.0
        %834 = vmatpush.msra.mxu0 %v652
        %835 = vmatpush.msra.mxu0 %v649
        %836 = vmatpush.msra.mxu0 %v646
        %837 = vmatpush.msra.mxu0 %v643
        %838 = vmatpush.msra.mxu0 %v640
        %839 = vmatpush.msra.mxu0 %v637
        %840 = vmatpush.msra.mxu0 %v634
        %841 = vmatpush.msra.mxu0 %v631
        %842 = vmatmul.f32.gmra.mxu0 %v680
        %v843 = vpop.f32.mrf.mxu0
        %v844 = vadd.f32 0.0, %v843
        %845 = vmatmul.f32.gmra.mxu0 %v683
        %v846 = vpop.f32.mrf.mxu0
        %v847 = vadd.f32 0.0, %v846
        %848 = vmatmul.f32.gmra.mxu0 %v686
        %v849 = vpop.f32.mrf.mxu0
        %v850 = vadd.f32 0.0, %v849
        %851 = vmatmul.f32.gmra.mxu0 %v689
        %v852 = vpop.f32.mrf.mxu0
        %v853 = vadd.f32 0.0, %v852
        %854 = vmatmul.f32.gmra.mxu0 %v692
        %v855 = vpop.f32.mrf.mxu0
        %v856 = vadd.f32 0.0, %v855
        %857 = vmatmul.f32.gmra.mxu0 %v695
        %v858 = vpop.f32.mrf.mxu0
        %v859 = vadd.f32 0.0, %v858
        %860 = vmatmul.f32.gmra.mxu0 %v698
        %v861 = vpop.f32.mrf.mxu0
        %v862 = vadd.f32 0.0, %v861
        %863 = vmatmul.f32.gmra.mxu0 %v701
        %v864 = vpop.f32.mrf.mxu0
        %v865 = vadd.f32 0.0, %v864
        %866 = vdwg.mxu0
        %867 = vmatpush.msra.mxu0 0.0
        %868 = vmatpush.msra.mxu0 0.0
        %869 = vmatpush.msra.mxu0 0.0
        %870 = vmatpush.msra.mxu0 0.0
        %871 = vmatpush.msra.mxu0 0.0
        %872 = vmatpush.msra.mxu0 0.0
        %873 = vmatpush.msra.mxu0 0.0
        %874 = vmatpush.msra.mxu0 0.0
        %875 = vmatpush.msra.mxu0 %v676
        %876 = vmatpush.msra.mxu0 %v673
        %877 = vmatpush.msra.mxu0 %v670
        %878 = vmatpush.msra.mxu0 %v667
        %879 = vmatpush.msra.mxu0 %v664
        %880 = vmatpush.msra.mxu0 %v661
        %881 = vmatpush.msra.mxu0 %v658
        %882 = vmatpush.msra.mxu0 %v655
        %883 = vmatmul.f32.gmra.mxu0 %v680
        %v884 = vpop.f32.mrf.mxu0
        %v885 = vadd.f32 0.0, %v884
        %886 = vmatmul.f32.gmra.mxu0 %v683
        %v887 = vpop.f32.mrf.mxu0
        %v888 = vadd.f32 0.0, %v887
        %889 = vmatmul.f32.gmra.mxu0 %v686
        %v890 = vpop.f32.mrf.mxu0
        %v891 = vadd.f32 0.0, %v890
        %892 = vmatmul.f32.gmra.mxu0 %v689
        %v893 = vpop.f32.mrf.mxu0
        %v894 = vadd.f32 0.0, %v893
        %895 = vmatmul.f32.gmra.mxu0 %v692
        %v896 = vpop.f32.mrf.mxu0
        %v897 = vadd.f32 0.0, %v896
        %898 = vmatmul.f32.gmra.mxu0 %v695
        %v899 = vpop.f32.mrf.mxu0
        %v900 = vadd.f32 0.0, %v899
        %901 = vmatmul.f32.gmra.mxu0 %v698
        %v902 = vpop.f32.mrf.mxu0
        %v903 = vadd.f32 0.0, %v902
        %904 = vmatmul.f32.gmra.mxu0 %v701
        %v905 = vpop.f32.mrf.mxu0
        %v906 = vadd.f32 0.0, %v905
        %907 = vdwg.mxu0
        %v908 = vmul.f32 %v721, %v721
        %v909 = vmul.f32 %v724, %v724
        %v910 = vmul.f32 %v727, %v727
        %v911 = vmul.f32 %v730, %v730
        %v912 = vmul.f32 %v733, %v733
        %v913 = vmul.f32 %v736, %v736
        %v914 = vmul.f32 %v739, %v739
        %v915 = vmul.f32 %v742, %v742
        %v916 = vsub.f32 %v803, %v908
        %v917 = vsub.f32 %v806, %v909
        %v918 = vsub.f32 %v809, %v910
        %v919 = vsub.f32 %v812, %v911
        %v920 = vsub.f32 %v815, %v912
        %v921 = vsub.f32 %v818, %v913
        %v922 = vsub.f32 %v821, %v914
        %v923 = vsub.f32 %v824, %v915
        %v924 = vmul.f32 %v762, %v762
        %v925 = vmul.f32 %v765, %v765
        %v926 = vmul.f32 %v768, %v768
        %v927 = vmul.f32 %v771, %v771
        %v928 = vmul.f32 %v774, %v774
        %v929 = vmul.f32 %v777, %v777
        %v930 = vmul.f32 %v780, %v780
        %v931 = vmul.f32 %v783, %v783
        %v932 = vsub.f32 %v844, %v924
        %v933 = vsub.f32 %v847, %v925
        %v934 = vsub.f32 %v850, %v926
        %v935 = vsub.f32 %v853, %v927
        %v936 = vsub.f32 %v856, %v928
        %v937 = vsub.f32 %v859, %v929
        %v938 = vsub.f32 %v862, %v930
        %v939 = vsub.f32 %v865, %v931
        %v940 = vmul.f32 %v721, %v762
        %v941 = vmul.f32 %v724, %v765
        %v942 = vmul.f32 %v727, %v768
        %v943 = vmul.f32 %v730, %v771
        %v944 = vmul.f32 %v733, %v774
        %v945 = vmul.f32 %v736, %v777
        %v946 = vmul.f32 %v739, %v780
        %v947 = vmul.f32 %v742, %v783
        %v948 = vsub.f32 %v885, %v940
        %v949 = vsub.f32 %v888, %v941
        %v950 = vsub.f32 %v891, %v942
        %v951 = vsub.f32 %v894, %v943
        %v952 = vsub.f32 %v897, %v944
        %v953 = vsub.f32 %v900, %v945
        %v954 = vsub.f32 %v903, %v946
        %v955 = vsub.f32 %v906, %v947
        %v956 = vmul.f32 %v721, 2.0
        %v957 = vmul.f32 %v724, 2.0
        %v958 = vmul.f32 %v727, 2.0
        %v959 = vmul.f32 %v730, 2.0
        %v960 = vmul.f32 %v733, 2.0
        %v961 = vmul.f32 %v736, 2.0
        %v962 = vmul.f32 %v739, 2.0
        %v963 = vmul.f32 %v742, 2.0
        %v964 = vmul.f32 %v956, %v762
        %v965 = vmul.f32 %v957, %v765
        %v966 = vmul.f32 %v958, %v768
        %v967 = vmul.f32 %v959, %v771
        %v968 = vmul.f32 %v960, %v774
        %v969 = vmul.f32 %v961, %v777
        %v970 = vmul.f32 %v962, %v780
        %v971 = vmul.f32 %v963, %v783
        %v972 = vadd.f32 %v964, 0.0001
        %v973 = vadd.f32 %v965, 0.0001
        %v974 = vadd.f32 %v966, 0.0001
        %v975 = vadd.f32 %v967, 0.0001
        %v976 = vadd.f32 %v968, 0.0001
        %v977 = vadd.f32 %v969, 0.0001
        %v978 = vadd.f32 %v970, 0.0001
        %v979 = vadd.f32 %v971, 0.0001
        %v980 = vmul.f32 %v948, 2.0
        %v981 = vmul.f32 %v949, 2.0
        %v982 = vmul.f32 %v950, 2.0
        %v983 = vmul.f32 %v951, 2.0
        %v984 = vmul.f32 %v952, 2.0
        %v985 = vmul.f32 %v953, 2.0
        %v986 = vmul.f32 %v954, 2.0
        %v987 = vmul.f32 %v955, 2.0
        %v988 = vadd.f32 %v980, 0.0009
        %v989 = vadd.f32 %v981, 0.0009
        %v990 = vadd.f32 %v982, 0.0009
        %v991 = vadd.f32 %v983, 0.0009
        %v992 = vadd.f32 %v984, 0.0009
        %v993 = vadd.f32 %v985, 0.0009
        %v994 = vadd.f32 %v986, 0.0009
        %v995 = vadd.f32 %v987, 0.0009
        %v996 = vmul.f32 %v972, %v988
        %v997 = vmul.f32 %v973, %v989
        %v998 = vmul.f32 %v974, %v990
        %v999 = vmul.f32 %v975, %v991
        %v1000 = vmul.f32 %v976, %v992
        %v1001 = vmul.f32 %v977, %v993
        %v1002 = vmul.f32 %v978, %v994
        %v1003 = vmul.f32 %v979, %v995
        %v1004 = vadd.f32 %v908, %v924
        %v1005 = vadd.f32 %v909, %v925
        %v1006 = vadd.f32 %v910, %v926
        %v1007 = vadd.f32 %v911, %v927
        %v1008 = vadd.f32 %v912, %v928
        %v1009 = vadd.f32 %v913, %v929
        %v1010 = vadd.f32 %v914, %v930
        %v1011 = vadd.f32 %v915, %v931
        %v1012 = vadd.f32 %v1004, 0.0001
        %v1013 = vadd.f32 %v1005, 0.0001
        %v1014 = vadd.f32 %v1006, 0.0001
        %v1015 = vadd.f32 %v1007, 0.0001
        %v1016 = vadd.f32 %v1008, 0.0001
        %v1017 = vadd.f32 %v1009, 0.0001
        %v1018 = vadd.f32 %v1010, 0.0001
        %v1019 = vadd.f32 %v1011, 0.0001
        %v1020 = vadd.f32 %v916, %v932
        %v1021 = vadd.f32 %v917, %v933
        %v1022 = vadd.f32 %v918, %v934
        %v1023 = vadd.f32 %v919, %v935
        %v1024 = vadd.f32 %v920, %v936
        %v1025 = vadd.f32 %v921, %v937
        %v1026 = vadd.f32 %v922, %v938
        %v1027 = vadd.f32 %v923, %v939
        %v1028 = vadd.f32 %v1020, 0.0009
        %v1029 = vadd.f32 %v1021, 0.0009
        %v1030 = vadd.f32 %v1022, 0.0009
        %v1031 = vadd.f32 %v1023, 0.0009
        %v1032 = vadd.f32 %v1024, 0.0009
        %v1033 = vadd.f32 %v1025, 0.0009
        %v1034 = vadd.f32 %v1026, 0.0009
        %v1035 = vadd.f32 %v1027, 0.0009
        %v1036 = vmul.f32 %v1012, %v1028
        %v1037 = vmul.f32 %v1013, %v1029
        %v1038 = vmul.f32 %v1014, %v1030
        %v1039 = vmul.f32 %v1015, %v1031
        %v1040 = vmul.f32 %v1016, %v1032
        %v1041 = vmul.f32 %v1017, %v1033
        %v1042 = vmul.f32 %v1018, %v1034
        %v1043 = vmul.f32 %v1019, %v1035
        %v1044 = vrcp.pop %v1036
        %v1045 = vrcp.pop %v1037
        %v1046 = vrcp.pop %v1038
        %v1047 = vrcp.pop %v1039
        %v1048 = vrcp.pop %v1040
        %v1049 = vrcp.pop %v1041
        %v1050 = vrcp.pop %v1042
        %v1051 = vrcp.pop %v1043
        %v1052 = vmul.f32 %v1036, %v1044
        %v1053 = vmul.f32 %v1037, %v1045
        %v1054 = vmul.f32 %v1038, %v1046
        %v1055 = vmul.f32 %v1039, %v1047
        %v1056 = vmul.f32 %v1040, %v1048
        %v1057 = vmul.f32 %v1041, %v1049
        %v1058 = vmul.f32 %v1042, %v1050
        %v1059 = vmul.f32 %v1043, %v1051
        %v1060 = vsub.f32 2.0, %v1052
        %v1061 = vsub.f32 2.0, %v1053
        %v1062 = vsub.f32 2.0, %v1054
        %v1063 = vsub.f32 2.0, %v1055
        %v1064 = vsub.f32 2.0, %v1056
        %v1065 = vsub.f32 2.0, %v1057
        %v1066 = vsub.f32 2.0, %v1058
        %v1067 = vsub.f32 2.0, %v1059
        %v1068 = vmul.f32 %v1044, %v1060
        %v1069 = vmul.f32 %v1045, %v1061
        %v1070 = vmul.f32 %v1046, %v1062
        %v1071 = vmul.f32 %v1047, %v1063
        %v1072 = vmul.f32 %v1048, %v1064
        %v1073 = vmul.f32 %v1049, %v1065
        %v1074 = vmul.f32 %v1050, %v1066
        %v1075 = vmul.f32 %v1051, %v1067
        %v1076 = vmul.f32 %v996, %v1068
        %v1077 = vmul.f32 %v997, %v1069
        %v1078 = vmul.f32 %v998, %v1070
        %v1079 = vmul.f32 %v999, %v1071
        %v1080 = vmul.f32 %v1000, %v1072
        %v1081 = vmul.f32 %v1001, %v1073
        %v1082 = vmul.f32 %v1002, %v1074
        %v1083 = vmul.f32 %v1003, %v1075
        %v1084 = vsel %vm420, %v1076, 0.0
        %v1085 = vsel %vm420, %v1077, 0.0
        %v1086 = vadd.f32 %v1084, %v1085
        %v1087 = vsel %vm420, %v1078, 0.0
        %v1088 = vadd.f32 %v1086, %v1087
        %v1089 = vsel %vm420, %v1079, 0.0
        %v1090 = vadd.f32 %v1088, %v1089
        %v1091 = vsel %vm420, %v1080, 0.0
        %v1092 = vadd.f32 %v1090, %v1091
        %v1093 = vsel %vm420, %v1081, 0.0
        %v1094 = vadd.f32 %v1092, %v1093
        %v1095 = vsel %vm420, %v1082, 0.0
        %v1096 = vadd.f32 %v1094, %v1095
        %v1097 = vsel %vm420, %v1083, 0.0
        %v1098 = vadd.f32 %v1096, %v1097
        %1099 = vadd.xlane.f32.xlu0 %v1098
        %v1100 = vpop.xlane.xlu0 %1099
        %v1101 = vrot.slane %v1100, 4
        %v1102 = vadd.f32 %v1100, %v1101
        %v1103 = vrot.slane %v1102, 2
        %v1104 = vadd.f32 %v1102, %v1103
        %v1105 = vrot.slane %v1104, 1
        %v1106 = vadd.f32 %v1104, %v1105
        %s1107 = vtos %v1106
        %1108 = vmatpush.msra.mxu0 0.0
        %1109 = vmatpush.msra.mxu0 0.0
        %1110 = vmatpush.msra.mxu0 0.0
        %1111 = vmatpush.msra.mxu0 0.0
        %1112 = vmatpush.msra.mxu0 0.0
        %1113 = vmatpush.msra.mxu0 0.0
        %1114 = vmatpush.msra.mxu0 0.0
        %1115 = vmatpush.msra.mxu0 0.0
        %1116 = vmatpush.msra.mxu0 0.0
        %1117 = vmatpush.msra.mxu0 0.0
        %1118 = vmatpush.msra.mxu0 0.0
        %1119 = vmatpush.msra.mxu0 0.0
        %1120 = vmatpush.msra.mxu0 0.0
        %1121 = vmatpush.msra.mxu0 0.0
        %1122 = vmatpush.msra.mxu0 %v355
        %1123 = vmatpush.msra.mxu0 %v354
        %1124 = vmatmul.f32.gmra.mxu0 %v422
        %v1125 = vpop.f32.mrf.mxu0
        %v1126 = vadd.f32 0.0, %v1125
        %1127 = vmatmul.f32.gmra.mxu0 %v425
        %v1128 = vpop.f32.mrf.mxu0
        %v1129 = vadd.f32 0.0, %v1128
        %1130 = vmatmul.f32.gmra.mxu0 %v428
        %v1131 = vpop.f32.mrf.mxu0
        %v1132 = vadd.f32 0.0, %v1131
        %1133 = vmatmul.f32.gmra.mxu0 %v431
        %v1134 = vpop.f32.mrf.mxu0
        %v1135 = vadd.f32 0.0, %v1134
        %1136 = vmatmul.f32.gmra.mxu0 %v434
        %v1137 = vpop.f32.mrf.mxu0
        %v1138 = vadd.f32 0.0, %v1137
        %1139 = vmatmul.f32.gmra.mxu0 %v437
        %v1140 = vpop.f32.mrf.mxu0
        %v1141 = vadd.f32 0.0, %v1140
        %1142 = vmatmul.f32.gmra.mxu0 %v440
        %v1143 = vpop.f32.mrf.mxu0
        %v1144 = vadd.f32 0.0, %v1143
        %1145 = vmatmul.f32.gmra.mxu0 %v443
        %v1146 = vpop.f32.mrf.mxu0
        %v1147 = vadd.f32 0.0, %v1146
        %1148 = vdwg.mxu0
        %v1150 = vsel %vm420, %v388, 0
        %v1153 = vsel %vm420, %v389, 0
        %v1156 = vsel %vm420, %v390, 0
        %v1159 = vsel %vm420, %v391, 0
        %v1162 = vsel %vm420, %v392, 0
        %v1165 = vsel %vm420, %v393, 0
        %v1168 = vsel %vm420, %v394, 0
        %v1171 = vsel %vm420, %v395, 0
        %1173 = vmatpush.msra.mxu0 0.0
        %1174 = vmatpush.msra.mxu0 0.0
        %1175 = vmatpush.msra.mxu0 0.0
        %1176 = vmatpush.msra.mxu0 0.0
        %1177 = vmatpush.msra.mxu0 0.0
        %1178 = vmatpush.msra.mxu0 0.0
        %1179 = vmatpush.msra.mxu0 0.0
        %1180 = vmatpush.msra.mxu0 0.0
        %1181 = vmatpush.msra.mxu0 0.0
        %1182 = vmatpush.msra.mxu0 0.0
        %1183 = vmatpush.msra.mxu0 0.0
        %1184 = vmatpush.msra.mxu0 0.0
        %1185 = vmatpush.msra.mxu0 0.0
        %1186 = vmatpush.msra.mxu0 0.0
        %1187 = vmatpush.msra.mxu0 %v355
        %1188 = vmatpush.msra.mxu0 %v354
        %1189 = vmatmul.f32.gmra.mxu0 %v1150
        %v1190 = vpop.f32.mrf.mxu0
        %v1191 = vadd.f32 0.0, %v1190
        %1192 = vmatmul.f32.gmra.mxu0 %v1153
        %v1193 = vpop.f32.mrf.mxu0
        %v1194 = vadd.f32 0.0, %v1193
        %1195 = vmatmul.f32.gmra.mxu0 %v1156
        %v1196 = vpop.f32.mrf.mxu0
        %v1197 = vadd.f32 0.0, %v1196
        %1198 = vmatmul.f32.gmra.mxu0 %v1159
        %v1199 = vpop.f32.mrf.mxu0
        %v1200 = vadd.f32 0.0, %v1199
        %1201 = vmatmul.f32.gmra.mxu0 %v1162
        %v1202 = vpop.f32.mrf.mxu0
        %v1203 = vadd.f32 0.0, %v1202
        %1204 = vmatmul.f32.gmra.mxu0 %v1165
        %v1205 = vpop.f32.mrf.mxu0
        %v1206 = vadd.f32 0.0, %v1205
        %1207 = vmatmul.f32.gmra.mxu0 %v1168
        %v1208 = vpop.f32.mrf.mxu0
        %v1209 = vadd.f32 0.0, %v1208
        %1210 = vmatmul.f32.gmra.mxu0 %v1171
        %v1211 = vpop.f32.mrf.mxu0
        %v1212 = vadd.f32 0.0, %v1211
        %1213 = vdwg.mxu0
        %v1215 = vsel %vm678, %v356, 0
        %v1218 = vsel %vm678, %v357, 0
        %v1221 = vsel %vm678, %v358, 0
        %v1224 = vsel %vm678, %v359, 0
        %v1227 = vsel %vm678, %v360, 0
        %v1230 = vsel %vm678, %v361, 0
        %v1233 = vsel %vm678, %v362, 0
        %v1236 = vsel %vm678, %v363, 0
        %1238 = vmatpush.msra.mxu0 0.0
        %1239 = vmatpush.msra.mxu0 0.0
        %1240 = vmatpush.msra.mxu0 0.0
        %1241 = vmatpush.msra.mxu0 0.0
        %1242 = vmatpush.msra.mxu0 0.0
        %1243 = vmatpush.msra.mxu0 0.0
        %1244 = vmatpush.msra.mxu0 0.0
        %1245 = vmatpush.msra.mxu0 0.0
        %1246 = vmatpush.msra.mxu0 %v379
        %1247 = vmatpush.msra.mxu0 %v378
        %1248 = vmatpush.msra.mxu0 %v377
        %1249 = vmatpush.msra.mxu0 %v376
        %1250 = vmatpush.msra.mxu0 %v375
        %1251 = vmatpush.msra.mxu0 %v374
        %1252 = vmatpush.msra.mxu0 %v373
        %1253 = vmatpush.msra.mxu0 %v372
        %1254 = vmatmul.f32.gmra.mxu0 %v1215
        %v1255 = vpop.f32.mrf.mxu0
        %v1256 = vadd.f32 0.0, %v1255
        %1257 = vmatmul.f32.gmra.mxu0 %v1218
        %v1258 = vpop.f32.mrf.mxu0
        %v1259 = vadd.f32 0.0, %v1258
        %1260 = vmatmul.f32.gmra.mxu0 %v1221
        %v1261 = vpop.f32.mrf.mxu0
        %v1262 = vadd.f32 0.0, %v1261
        %1263 = vmatmul.f32.gmra.mxu0 %v1224
        %v1264 = vpop.f32.mrf.mxu0
        %v1265 = vadd.f32 0.0, %v1264
        %1266 = vmatmul.f32.gmra.mxu0 %v1227
        %v1267 = vpop.f32.mrf.mxu0
        %v1268 = vadd.f32 0.0, %v1267
        %1269 = vmatmul.f32.gmra.mxu0 %v1230
        %v1270 = vpop.f32.mrf.mxu0
        %v1271 = vadd.f32 0.0, %v1270
        %1272 = vmatmul.f32.gmra.mxu0 %v1233
        %v1273 = vpop.f32.mrf.mxu0
        %v1274 = vadd.f32 0.0, %v1273
        %1275 = vmatmul.f32.gmra.mxu0 %v1236
        %v1276 = vpop.f32.mrf.mxu0
        %v1277 = vadd.f32 0.0, %v1276
        %1278 = vdwg.mxu0
        %v1280 = vsel %vm678, %v364, 0
        %v1283 = vsel %vm678, %v365, 0
        %v1286 = vsel %vm678, %v366, 0
        %v1289 = vsel %vm678, %v367, 0
        %v1292 = vsel %vm678, %v368, 0
        %v1295 = vsel %vm678, %v369, 0
        %v1298 = vsel %vm678, %v370, 0
        %v1301 = vsel %vm678, %v371, 0
        %1303 = vmatpush.msra.mxu0 0.0
        %1304 = vmatpush.msra.mxu0 0.0
        %1305 = vmatpush.msra.mxu0 0.0
        %1306 = vmatpush.msra.mxu0 0.0
        %1307 = vmatpush.msra.mxu0 0.0
        %1308 = vmatpush.msra.mxu0 0.0
        %1309 = vmatpush.msra.mxu0 0.0
        %1310 = vmatpush.msra.mxu0 0.0
        %1311 = vmatpush.msra.mxu0 %v395
        %1312 = vmatpush.msra.mxu0 %v394
        %1313 = vmatpush.msra.mxu0 %v393
        %1314 = vmatpush.msra.mxu0 %v392
        %1315 = vmatpush.msra.mxu0 %v391
        %1316 = vmatpush.msra.mxu0 %v390
        %1317 = vmatpush.msra.mxu0 %v389
        %1318 = vmatpush.msra.mxu0 %v388
        %1319 = vmatmul.f32.gmra.mxu0 %v1280
        %v1320 = vpop.f32.mrf.mxu0
        %v1321 = vadd.f32 0.0, %v1320
        %1322 = vmatmul.f32.gmra.mxu0 %v1283
        %v1323 = vpop.f32.mrf.mxu0
        %v1324 = vadd.f32 0.0, %v1323
        %1325 = vmatmul.f32.gmra.mxu0 %v1286
        %v1326 = vpop.f32.mrf.mxu0
        %v1327 = vadd.f32 0.0, %v1326
        %1328 = vmatmul.f32.gmra.mxu0 %v1289
        %v1329 = vpop.f32.mrf.mxu0
        %v1330 = vadd.f32 0.0, %v1329
        %1331 = vmatmul.f32.gmra.mxu0 %v1292
        %v1332 = vpop.f32.mrf.mxu0
        %v1333 = vadd.f32 0.0, %v1332
        %1334 = vmatmul.f32.gmra.mxu0 %v1295
        %v1335 = vpop.f32.mrf.mxu0
        %v1336 = vadd.f32 0.0, %v1335
        %1337 = vmatmul.f32.gmra.mxu0 %v1298
        %v1338 = vpop.f32.mrf.mxu0
        %v1339 = vadd.f32 0.0, %v1338
        %1340 = vmatmul.f32.gmra.mxu0 %v1301
        %v1341 = vpop.f32.mrf.mxu0
        %v1342 = vadd.f32 0.0, %v1341
        %1343 = vdwg.mxu0
        %v1344 = vand.u32 2147483647, %v1191
        %v1345 = vand.u32 2147483647, %v1194
        %v1346 = vand.u32 2147483647, %v1197
        %v1347 = vand.u32 2147483647, %v1200
        %v1348 = vand.u32 2147483647, %v1203
        %v1349 = vand.u32 2147483647, %v1206
        %v1350 = vand.u32 2147483647, %v1209
        %v1351 = vand.u32 2147483647, %v1212
        %v1352 = vsel %vm420, %v1344, 0.0
        %v1353 = vsel %vm420, %v1346, 0.0
        %v1354 = vadd.f32 %v1352, %v1353
        %v1355 = vsel %vm420, %v1348, 0.0
        %v1356 = vadd.f32 %v1354, %v1355
        %v1357 = vsel %vm420, %v1350, 0.0
        %v1358 = vadd.f32 %v1356, %v1357
        %v1359 = vsel %vm420, %v1345, 0.0
        %v1360 = vsel %vm420, %v1347, 0.0
        %v1361 = vadd.f32 %v1359, %v1360
        %v1362 = vsel %vm420, %v1349, 0.0
        %v1363 = vadd.f32 %v1361, %v1362
        %v1364 = vsel %vm420, %v1351, 0.0
        %v1365 = vadd.f32 %v1363, %v1364
        %v1366 = vrcp.pop 4.0
        %v1367 = vmul.f32 4.0, %v1366
        %v1368 = vsub.f32 1.0, %v1367
        %v1369 = vmul.f32 %v1366, %v1368
        %v1370 = vadd.f32 %v1366, %v1369
        %vm1371 = vweird.f32 %v1366
        %v1372 = vsel %vm1371, %v1366, %v1370
        %v1373 = vmul.f32 %v1358, %v1372
        %v1374 = vmul.f32 %v1365, %v1372
        %v1375 = vsub.f32 0.0, %v1373
        %v1376 = vsub.f32 0.0, %v1374
        %v1377 = vmul.f32 %v1375, 1.442695
        %v1378 = vpow.pop %v1377
        %v1379 = vmul.f32 %v1376, 1.442695
        %v1380 = vpow.pop %v1379
        %v1381 = vand.u32 2147483647, %v1321
        %v1382 = vand.u32 2147483647, %v1324
        %v1383 = vand.u32 2147483647, %v1327
        %v1384 = vand.u32 2147483647, %v1330
        %v1385 = vand.u32 2147483647, %v1333
        %v1386 = vand.u32 2147483647, %v1336
        %v1387 = vand.u32 2147483647, %v1339
        %v1388 = vand.u32 2147483647, %v1342
        %v1389 = vsel %vm420, %v1381, 0.0
        %v1390 = vsel %vm420, %v1383, 0.0
        %v1391 = vadd.f32 %v1389, %v1390
        %v1392 = vsel %vm420, %v1385, 0.0
        %v1393 = vadd.f32 %v1391, %v1392
        %v1394 = vsel %vm420, %v1387, 0.0
        %v1395 = vadd.f32 %v1393, %v1394
        %v1396 = vsel %vm420, %v1382, 0.0
        %v1397 = vsel %vm420, %v1384, 0.0
        %v1398 = vadd.f32 %v1396, %v1397
        %v1399 = vsel %vm420, %v1386, 0.0
        %v1400 = vadd.f32 %v1398, %v1399
        %v1401 = vsel %vm420, %v1388, 0.0
        %v1402 = vadd.f32 %v1400, %v1401
        %v1403 = vmul.f32 %v1395, %v1372
        %v1404 = vmul.f32 %v1402, %v1372
        %v1405 = vsub.f32 0.0, %v1403
        %v1406 = vsub.f32 0.0, %v1404
        %v1407 = vmul.f32 %v1405, 1.442695
        %v1408 = vpow.pop %v1407
        %v1409 = vmul.f32 %v1406, 1.442695
        %v1410 = vpow.pop %v1409
        %v1411 = vand.u32 2147483647, %v1126
        %v1412 = vand.u32 2147483647, %v1129
        %v1413 = vand.u32 2147483647, %v1132
        %v1414 = vand.u32 2147483647, %v1135
        %v1415 = vand.u32 2147483647, %v1138
        %v1416 = vand.u32 2147483647, %v1141
        %v1417 = vand.u32 2147483647, %v1144
        %v1418 = vand.u32 2147483647, %v1147
        %v1419 = vmul.f32 %v1411, %v1378
        %v1420 = vmul.f32 %v1412, %v1380
        %v1421 = vmul.f32 %v1413, %v1378
        %v1422 = vmul.f32 %v1414, %v1380
        %v1423 = vmul.f32 %v1415, %v1378
        %v1424 = vmul.f32 %v1416, %v1380
        %v1425 = vmul.f32 %v1417, %v1378
        %v1426 = vmul.f32 %v1418, %v1380
        %v1427 = vsel %vm420, %v1419, 0.0
        %v1428 = vsel %vm420, %v1420, 0.0
        %v1429 = vadd.f32 %v1427, %v1428
        %v1430 = vsel %vm420, %v1421, 0.0
        %v1431 = vadd.f32 %v1429, %v1430
        %v1432 = vsel %vm420, %v1422, 0.0
        %v1433 = vadd.f32 %v1431, %v1432
        %v1434 = vsel %vm420, %v1423, 0.0
        %v1435 = vadd.f32 %v1433, %v1434
        %v1436 = vsel %vm420, %v1424, 0.0
        %v1437 = vadd.f32 %v1435, %v1436
        %v1438 = vsel %vm420, %v1425, 0.0
        %v1439 = vadd.f32 %v1437, %v1438
        %v1440 = vsel %vm420, %v1426, 0.0
        %v1441 = vadd.f32 %v1439, %v1440
        %1442 = vadd.xlane.f32.xlu0 %v1441
        %v1443 = vpop.xlane.xlu0 %1442
        %v1444 = vrot.slane %v1443, 4
        %v1445 = vadd.f32 %v1443, %v1444
        %v1446 = vrot.slane %v1445, 2
        %v1447 = vadd.f32 %v1445, %v1446
        %v1448 = vrot.slane %v1447, 1
        %v1449 = vadd.f32 %v1447, %v1448
        %s1450 = vtos %v1449
        %v1451 = vand.u32 2147483647, %v1256
        %v1452 = vand.u32 2147483647, %v1259
        %v1453 = vand.u32 2147483647, %v1262
        %v1454 = vand.u32 2147483647, %v1265
        %v1455 = vand.u32 2147483647, %v1268
        %v1456 = vand.u32 2147483647, %v1271
        %v1457 = vand.u32 2147483647, %v1274
        %v1458 = vand.u32 2147483647, %v1277
        %v1459 = vmul.f32 %v1451, %v1408
        %v1460 = vmul.f32 %v1452, %v1410
        %v1461 = vmul.f32 %v1453, %v1408
        %v1462 = vmul.f32 %v1454, %v1410
        %v1463 = vmul.f32 %v1455, %v1408
        %v1464 = vmul.f32 %v1456, %v1410
        %v1465 = vmul.f32 %v1457, %v1408
        %v1466 = vmul.f32 %v1458, %v1410
        %v1467 = vsel %vm420, %v1459, 0.0
        %v1468 = vsel %vm420, %v1460, 0.0
        %v1469 = vadd.f32 %v1467, %v1468
        %v1470 = vsel %vm420, %v1461, 0.0
        %v1471 = vadd.f32 %v1469, %v1470
        %v1472 = vsel %vm420, %v1462, 0.0
        %v1473 = vadd.f32 %v1471, %v1472
        %v1474 = vsel %vm420, %v1463, 0.0
        %v1475 = vadd.f32 %v1473, %v1474
        %v1476 = vsel %vm420, %v1464, 0.0
        %v1477 = vadd.f32 %v1475, %v1476
        %v1478 = vsel %vm420, %v1465, 0.0
        %v1479 = vadd.f32 %v1477, %v1478
        %v1480 = vsel %vm420, %v1466, 0.0
        %v1481 = vadd.f32 %v1479, %v1480
        %1482 = vadd.xlane.f32.xlu0 %v1481
        %v1483 = vpop.xlane.xlu0 %1482
        %v1484 = vrot.slane %v1483, 4
        %v1485 = vadd.f32 %v1483, %v1484
        %v1486 = vrot.slane %v1485, 2
        %v1487 = vadd.f32 %v1485, %v1486
        %v1488 = vrot.slane %v1487, 1
        %v1489 = vadd.f32 %v1487, %v1488
        %s1490 = vtos %v1489
        %v1491 = vsub.f32 %v372, %v380
        %v1492 = vsub.f32 %v373, %v381
        %v1493 = vsub.f32 %v374, %v382
        %v1494 = vsub.f32 %v375, %v383
        %v1495 = vsub.f32 %v376, %v384
        %v1496 = vsub.f32 %v377, %v385
        %v1497 = vsub.f32 %v378, %v386
        %v1498 = vsub.f32 %v379, %v387
        %v1499 = vand.u32 2147483647, %v1491
        %v1500 = vand.u32 2147483647, %v1492
        %v1501 = vand.u32 2147483647, %v1493
        %v1502 = vand.u32 2147483647, %v1494
        %v1503 = vand.u32 2147483647, %v1495
        %v1504 = vand.u32 2147483647, %v1496
        %v1505 = vand.u32 2147483647, %v1497
        %v1506 = vand.u32 2147483647, %v1498
        %v1507 = vsel %vm420, %v1499, 0.0
        %v1508 = vsel %vm420, %v1500, 0.0
        %v1509 = vadd.f32 %v1507, %v1508
        %v1510 = vsel %vm420, %v1501, 0.0
        %v1511 = vadd.f32 %v1509, %v1510
        %v1512 = vsel %vm420, %v1502, 0.0
        %v1513 = vadd.f32 %v1511, %v1512
        %v1514 = vsel %vm420, %v1503, 0.0
        %v1515 = vadd.f32 %v1513, %v1514
        %v1516 = vsel %vm420, %v1504, 0.0
        %v1517 = vadd.f32 %v1515, %v1516
        %v1518 = vsel %vm420, %v1505, 0.0
        %v1519 = vadd.f32 %v1517, %v1518
        %v1520 = vsel %vm420, %v1506, 0.0
        %v1521 = vadd.f32 %v1519, %v1520
        %1522 = vadd.xlane.f32.xlu0 %v1521
        %v1523 = vpop.xlane.xlu0 %1522
        %v1524 = vrot.slane %v1523, 4
        %v1525 = vadd.f32 %v1523, %v1524
        %v1526 = vrot.slane %v1525, 2
        %v1527 = vadd.f32 %v1525, %v1526
        %v1528 = vrot.slane %v1527, 1
        %v1529 = vadd.f32 %v1527, %v1528
        %s1530 = vtos %v1529
        %s1531 = smul.f32 %s1107, -0.0009765625
        %s1532 = smul.f32 %s1450, 0.00052083336
        %s1533 = sadd.f32 %s1531, %s1532
        %s1534 = smul.f32 %s1490, 0.00052083336
        %s1535 = sadd.f32 %s1533, %s1534
        %s1536 = smul.f32 %s1530, 4.882813e-07
        %s1537 = sadd.f32 %s1535, %s1536
        %v1538 = vstv %s1537
        %1539 = vst [vmem:[%s328] sm:$0xff] %v1538
        %s1540 = sand.u32 %s213, 1
        %s1541 = scalar_lea.sflag [#allocation3], %s1540
        %s1542 = sand.u32 %s213, 1
        %s1543 = smul.addr %s1542, 8
        %s1544 = scalar_lea.vmem [#allocation2], %s1543
        // Predicated region
        $region53: #{tpu_custom_call.1} parent=51 // pred_check
          %p1545 = pneg %p223
        $region54: #{tpu_custom_call.1} parent=51 // pred_check_branch
          %1547 = sbr.rel (%p1545) target = $region56
        $region55: #{tpu_custom_call.1} parent=51 // pred_region
          %1549 = vsyncadd %s1541, 0
          %s1550 = smul.addr %s22, 8
          %s1551 = scalar_lea.hbm %s8, %s1550
          %s1553 = sshll.u32 %s1544, 4
          %s1554 = int_to_ptr.vmem [resolvable:$true] %s1553
          %s1555 = sshll.u32 %s1551, 4
          %s1556 = int_to_ptr.hbm [resolvable:$true] %s1555
          %1558 = dma.vmem_to_hbm [thread:$0]  %s1554, 128, %s1556, %s1541
        $region56: #{tpu_custom_call.1} parent=51 // pred_fallthru
          _
      $region52: #{tpu_custom_call.1} parent=5 // pred_fallthru
        _
      %p1559 = scmp.le.s32.totalorder 2, %s17
      // Predicated region
      $region57: #{tpu_custom_call.1} parent=5 // pred_check
        %p1560 = pneg %p1559
      $region58: #{tpu_custom_call.1} parent=5 // pred_check_branch
        %1562 = sbr.rel (%p1560) target = $region60
      $region59: #{tpu_custom_call.1} parent=5 // pred_region
        %s1563 = ssub.s32 %s17, 2
        // Predicated region
        $region61: #{tpu_custom_call.1} parent=59 // pred_check
          %p1564 = pneg %p229
        $region62: #{tpu_custom_call.1} parent=59 // pred_check_branch
          %1566 = sbr.rel (%p1564) target = $region64
        $region63: #{tpu_custom_call.1} parent=59 // pred_region
          %s1567 = sand.u32 %s214, 1
          %s1568 = scalar_lea.sflag [#allocation3], %s1567
          %s1569 = sand.u32 %s214, 1
          %s1570 = smul.addr %s1569, 8
          %s1571 = scalar_lea.vmem [#allocation2], %s1570
          %1573 = dma.done %s1568, 128
        $region64: #{tpu_custom_call.1} parent=59 // pred_fallthru
          _
      $region60: #{tpu_custom_call.1} parent=5 // pred_fallthru
        _
    $region6: #{tpu_custom_call.1} parent=1 // loop_footer
      %s21 = sadd.s32 1, %s17
    $region7: #{tpu_custom_call.1} parent=1 // loop_footer_branch
      %16 = sbr.rel target = $region3
    $region8: #{tpu_custom_call.1} parent=1 // loop_exit
      _
    %1574 = vsyncpa [#allocation3], 1
    %s1575 = scalar_lea.sflag [#allocation3], 1
    %1576 = vsyncpa %s1575, 1

</llo_original>
